<compile_context>
chip_gen: v6e
topology: v6e:2x2x1
jax: 0.10.0
libtpu: 0.0.40
codegen_flags: <defaults>
</compile_context>

<pallas_src>
import functools

import jax
import jax.numpy as jnp
from jax.experimental import pallas as pl
from jax.experimental.pallas import tpu as pltpu


def _plain_net_kernel(x0_ref, x1_ref, w_ref, b_ref, out_ref, *,
                      k0, k1, w0, w1, n_iters):
    """Fused two-scale anomaly score for one batch tile.

    x0_ref : [TB, C, N0]  scale-0 features (NCHW flattened; C on sublanes)
    x1_ref : [TB, C, N1]  scale-1 features
    w_ref  : [C, 1]       conv weight (single output channel), VMEM
    b_ref  : [1]          conv bias, SMEM
    out_ref: [TB, 1, 1]   averaged scores
    """
    tb, c, n0 = x0_ref.shape
    n1 = x1_ref.shape[2]
    n = max(n0, n1)

    w = w_ref[...].astype(jnp.float32)                           # [C, 1]
    bias = b_ref[0]

    def conv_abs(x_ref, pad_n):
        x = x_ref[...].astype(jnp.float32)                       # [TB, C, Ns]
        # 1x1 conv, single out channel == per-pixel channel dot; reduce along
        # the sublane (C) axis -- cheap VPU vreg accumulation.
        y = jnp.sum(x * w[None, :, :], axis=1) + bias            # [TB, Ns]
        y = jnp.abs(y)
        if pad_n > 0:
            # -1.0 sentinel: |y| >= 0 and the search threshold is >= 0, so
            # padded lanes never satisfy (v >= mid) / (v >= lo).
            pad = jnp.full((tb, pad_n), -1.0, dtype=jnp.float32)
            y = jnp.concatenate([y, pad], axis=-1)               # [TB, N]
        return y[None]                                           # [1, TB, N]

    # Both scales ride one operand -> ONE fused bisection (half the serial
    # cross-lane reduce chain vs. two back-to-back per-scale searches).
    v = jnp.concatenate([conv_abs(x0_ref, n - n0),
                         conv_abs(x1_ref, n - n1)], axis=0)      # [2, TB, N]

    # Per-row k / 1/k, hoisted out of the unrolled loop (trace-time constants).
    kf = jnp.concatenate(
        [jnp.full((1, tb, 1), float(k0), jnp.float32),
         jnp.full((1, tb, 1), float(k1), jnp.float32)], axis=0)  # [2, TB, 1]
    inv_k = jnp.concatenate(
        [jnp.full((1, tb, 1), 1.0 / k0, jnp.float32),
         jnp.full((1, tb, 1), 1.0 / k1, jnp.float32)], axis=0)   # [2, TB, 1]

    vmax = jnp.max(v, axis=-1, keepdims=True)                    # [2, TB, 1]

    # Binary-search the k-th largest value per row: invariant
    #   count(v >= lo) >= k   and   count(v >= hi) < k.
    def body(_, carry):
        lo, hi = carry
        mid = 0.5 * (lo + hi)
        # f32 count is exact up to 2^24 elements per row -- fine at these N.
        cnt = jnp.sum((v >= mid).astype(jnp.float32), axis=-1, keepdims=True)
        take_lo = cnt >= kf
        return jnp.where(take_lo, mid, lo), jnp.where(take_lo, hi, mid)

    lo, _ = jax.lax.fori_loop(
        0, n_iters, body, (jnp.zeros_like(vmax), vmax + 1.0), unroll=True)

    mask = (v >= lo).astype(jnp.float32)
    n_ge = jnp.sum(mask, axis=-1, keepdims=True)                 # >= k
    s_ge = jnp.sum(v * mask, axis=-1, keepdims=True)
    # Any elements counted beyond the exact top-k lie within one converged
    # search interval of the k-th value; charge them at the threshold `lo`.
    means = (s_ge - (n_ge - kf) * lo) * inv_k                    # [2, TB, 1]

    score = jnp.float32(w0) * means[0] + jnp.float32(w1) * means[1]  # [TB, 1]
    out_ref[...] = score[:, :, None]                             # [TB, 1, 1]


def _pick_batch_tile(B, C, N0, N1, itemsize, *, budget_bytes=24 << 20,
                     max_tb=8):
    """Largest batch tile that (a) divides B, (b) keeps double-buffered feature
    blocks under `budget_bytes` (v7x-safe), (c) leaves >= 2 grid steps so the
    'parallel' batch axis can shard across both v7x TensorCores."""
    per_row = 2 * C * (N0 + N1) * itemsize        # double-buffered bytes / row
    cap = int(min(max(1, budget_bytes // per_row), max_tb, B))
    best = 1
    for tb in range(1, cap + 1):
        if B % tb != 0:
            continue
        if B >= 2 and (B // tb) < 2:
            continue
        best = tb
    return best


def _vmem_limit_bytes(tb, C, N0, N1, itemsize):
    n = max(N0, N1)
    feat = 2 * tb * C * (N0 + N1) * itemsize      # double-buffered feature blocks
    wgt = 2 * C * 128 * 4                         # [C,1] weight pads to [C,128]; 2 bufs
    tmp = tb * C * n * 4 + 16 * tb * n * 4        # conv product + top-k temporaries
    est = feat + wgt + 2 * tmp + (4 << 20)
    return int(min(max(est, 32 << 20), 48 << 20))


def plain_net_forward(image, image_scale, w, b, *, n_scales=2, topk_rate=0.1,
                      n_iters=20, batch_tile=None, feature_dtype=None):
    """JAX/Pallas port of Plain_Net.forward.

    image, image_scale : [B, C, H, W]  (NCHW, matching the PyTorch module)
    w                  : [1, C, 1, 1]  conv weight (C = 512 in the module)
    b                  : [1]           conv bias
    feature_dtype      : optional (e.g. jnp.bfloat16) to halve HBM traffic on
                         v5e; compute stays f32 inside the kernel.
    returns            : [B, 1]
    """
    B, C, H0, W0 = image.shape
    Bs, Cs, H1, W1 = image_scale.shape
    assert Bs == B and Cs == C, (image.shape, image_scale.shape)
    N0, N1 = H0 * W0, H1 * W1
    k0 = max(int(N0 * topk_rate), 1)
    k1 = max(int(N1 * topk_rate), 1)

    # Free reshapes only -- NCHW stays NCHW; no transpose kernel in XLA.
    x0 = image.reshape(B, C, N0)
    x1 = image_scale.reshape(B, C, N1)
    if feature_dtype is not None:
        x0 = x0.astype(feature_dtype)
        x1 = x1.astype(feature_dtype)
    w_c1 = w.reshape(C, 1).astype(jnp.float32)                   # [C, 1]
    bias = b.reshape(1).astype(jnp.float32)

    itemsize = jnp.dtype(x0.dtype).itemsize
    tb = batch_tile if batch_tile is not None else _pick_batch_tile(
        B, C, N0, N1, itemsize)
    if B % tb != 0:
        raise ValueError(f"batch_tile={tb} must divide B={B}")
    grid = (B // tb,)

    # scale 0 uses `image`; scales 1..n_scales-1 all reuse `image_scale`
    # (matches the PyTorch loop). n_scales only enters through these weights;
    # the kernel always evaluates both operands.
    w0 = 1.0 / n_scales
    w1 = (n_scales - 1) / n_scales

    kernel = functools.partial(_plain_net_kernel, k0=k0, k1=k1,
                               w0=w0, w1=w1, n_iters=n_iters)

    # TODO(synk): for very large feature maps (per-row feature block beyond the
    # VMEM budget even at tb=1) add an N-chunk grid axis with a VMEM scratch
    # accumulator for y before the fused top-k pass.
    # TODO(synk): the [C,1] weight block pads to [C,128] in VMEM (~0.5 MiB over
    # 2 buffers); negligible today -- single-buffer it if that slack is needed
    # on the large-feature-map path.
    out = pl.pallas_call(
        kernel,
        out_shape=jax.ShapeDtypeStruct((B, 1, 1), jnp.float32),
        grid=grid,
        in_specs=[
            pl.BlockSpec((tb, C, N0), lambda i: (i, 0, 0)),
            pl.BlockSpec((tb, C, N1), lambda i: (i, 0, 0)),
            pl.BlockSpec((C, 1), lambda i: (0, 0)),
            pl.BlockSpec(memory_space=pltpu.MemorySpace.SMEM),
        ],
        out_specs=pl.BlockSpec((tb, 1, 1), lambda i: (i, 0, 0)),
        compiler_params=pltpu.CompilerParams(
            dimension_semantics=("parallel",),
            vmem_limit_bytes=_vmem_limit_bytes(tb, C, N0, N1, itemsize)),
    )(x0, x1, w_c1, bias)
    return out.reshape(B, 1)


def _reference_forward(image, image_scale, w, b, *, n_scales=2, topk_rate=0.1):
    """Pure-JAX reference mirroring the PyTorch code (for verification)."""
    wvec = w[0, :, 0, 0]
    pyramid = []
    for s in range(n_scales):
        feat = image if s == 0 else image_scale
        B = feat.shape[0]
        y = jnp.einsum('bchw,c->bhw', feat, wvec) + b[0]
        y = y.reshape(B, -1)
        k = max(int(y.shape[1] * topk_rate), 1)
        top = jax.lax.top_k(jnp.abs(y), k)[0]
        pyramid.append(jnp.mean(top, axis=1, keepdims=True))
    scores = jnp.concatenate(pyramid, axis=1)
    return jnp.mean(scores, axis=1).reshape(-1, 1)


if __name__ == "__main__":
    key = jax.random.PRNGKey(0)
    k1, k2, k3 = jax.random.split(key, 3)

    B, C = 2, 512          # C = 512 is fixed by the module's [1, 512, 1, 1] weight
    H0 = W0 = 16           # scale 0 ("image")
    H1 = W1 = 8            # scale 1 ("image_scale")

    image = jax.random.normal(k1, (B, C, H0, W0), dtype=jnp.float32)
    image_scale = jax.random.normal(k2, (B, C, H1, W1), dtype=jnp.float32)

    # Deterministic stand-in for torch.nn.init.kaiming_normal_ on [1,512,1,1]:
    # std = sqrt(2 / fan_in), fan_in = 512. Bias initialized to zeros([1]).
    w = jax.random.normal(k3, (1, C, 1, 1), dtype=jnp.float32) * jnp.sqrt(2.0 / C)
    b = jnp.zeros((1,), dtype=jnp.float32)

    out = plain_net_forward(image, image_scale, w, b, n_scales=2, topk_rate=0.1)
    out = jax.block_until_ready(out)

    ref = _reference_forward(image, image_scale, w, b, n_scales=2, topk_rate=0.1)
    assert out.shape == (B, 1), out.shape
    assert jnp.allclose(out, ref, atol=1e-4, rtol=1e-4), (out, ref)

    # TODO(synk): mixup_data / forward_metamix (Beta sampling, randperm) are
    # training-only host-side logic and are not ported to the kernel.
    print("KERNEL_OK")
</pallas_src>

<mosaic_0001>
module attributes {stable_mosaic.version = 11 : i64} {
  func.func @_plain_net_kernel(%arg0: i32, %arg1: memref<1x512x256xf32, #tpu.memory_space<vmem>>, %arg2: memref<1x512x64xf32, #tpu.memory_space<vmem>>, %arg3: memref<512x1xf32, #tpu.memory_space<vmem>>, %arg4: memref<1xf32, #tpu.memory_space<smem>>, %arg5: memref<1x1x1xf32, #tpu.memory_space<vmem>>) attributes {dimension_semantics = [#tpu.dimension_semantics<parallel>], iteration_bounds = array<i64: 2>, scalar_prefetch = 0 : i64, scratch_operands = 0 : i64, tpu.core_type = #tpu.core_type<tc>, window_params = [{transform_indices = @transform_0, window_bounds = array<i64: 1, 512, 256>}, {transform_indices = @transform_1, window_bounds = array<i64: 1, 512, 64>}, {pipeline_mode = #tpu.pipeline_mode<synchronous>, transform_indices = @transform_2, window_bounds = array<i64: 512, 1>}, {transform_indices = @transform_3, window_bounds = array<i64: 1>}, {transform_indices = @transform_4, window_bounds = array<i64: 1, 1, 1>}]} {
    %c0 = arith.constant 0 : index
    %c0_0 = arith.constant 0 : index
    %0 = vector.load %arg3[%c0, %c0_0] : memref<512x1xf32, #tpu.memory_space<vmem>>, vector<512x1xf32>
    %c0_1 = arith.constant 0 : index
    %1 = memref.load %arg4[%c0_1] : memref<1xf32, #tpu.memory_space<smem>>
    %c0_2 = arith.constant 0 : index
    %c0_3 = arith.constant 0 : index
    %c0_4 = arith.constant 0 : index
    %2 = vector.load %arg1[%c0_2, %c0_3, %c0_4] : memref<1x512x256xf32, #tpu.memory_space<vmem>>, vector<1x512x256xf32>
    %3 = vector.shape_cast %0 : vector<512x1xf32> to vector<1x512x1xf32>
    %4 = vector.broadcast %3 : vector<1x512x1xf32> to vector<1x512x256xf32>
    %5 = arith.mulf %2, %4 : vector<1x512x256xf32>
    %cst = arith.constant dense<0.000000e+00> : vector<1x256xf32>
    %6 = vector.multi_reduction <add>, %5, %cst [1] : vector<1x512x256xf32> to vector<1x256xf32>
    %7 = vector.broadcast %1 : f32 to vector<1x256xf32>
    %8 = arith.addf %6, %7 : vector<1x256xf32>
    %9 = math.absf %8 : vector<1x256xf32>
    %10 = vector.shape_cast %9 : vector<1x256xf32> to vector<1x1x256xf32>
    %c0_5 = arith.constant 0 : index
    %c0_6 = arith.constant 0 : index
    %c0_7 = arith.constant 0 : index
    %11 = vector.load %arg2[%c0_5, %c0_6, %c0_7] : memref<1x512x64xf32, #tpu.memory_space<vmem>>, vector<1x512x64xf32>
    %12 = vector.shape_cast %0 : vector<512x1xf32> to vector<1x512x1xf32>
    %13 = vector.broadcast %12 : vector<1x512x1xf32> to vector<1x512x64xf32>
    %14 = arith.mulf %11, %13 : vector<1x512x64xf32>
    %cst_8 = arith.constant dense<0.000000e+00> : vector<1x64xf32>
    %15 = vector.multi_reduction <add>, %14, %cst_8 [1] : vector<1x512x64xf32> to vector<1x64xf32>
    %16 = vector.broadcast %1 : f32 to vector<1x64xf32>
    %17 = arith.addf %15, %16 : vector<1x64xf32>
    %18 = math.absf %17 : vector<1x64xf32>
    %cst_9 = arith.constant -1.000000e+00 : f32
    %19 = vector.broadcast %cst_9 : f32 to vector<1x192xf32>
    %20 = tpu.concatenate %18, %19 in 1 : vector<1x64xf32>, vector<1x192xf32> -> vector<1x256xf32>
    %21 = vector.shape_cast %20 : vector<1x256xf32> to vector<1x1x256xf32>
    %22 = tpu.concatenate %10, %21 in 0 : vector<1x1x256xf32>, vector<1x1x256xf32> -> vector<2x1x256xf32>
    %cst_10 = arith.constant 2.500000e+01 : f32
    %23 = vector.broadcast %cst_10 : f32 to vector<1x1x1xf32>
    %cst_11 = arith.constant 6.000000e+00 : f32
    %24 = vector.broadcast %cst_11 : f32 to vector<1x1x1xf32>
    %25 = tpu.concatenate %23, %24 in 0 : vector<1x1x1xf32>, vector<1x1x1xf32> -> vector<2x1x1xf32>
    %cst_12 = arith.constant 4.000000e-02 : f32
    %26 = vector.broadcast %cst_12 : f32 to vector<1x1x1xf32>
    %cst_13 = arith.constant 0.166666672 : f32
    %27 = vector.broadcast %cst_13 : f32 to vector<1x1x1xf32>
    %28 = tpu.concatenate %26, %27 in 0 : vector<1x1x1xf32>, vector<1x1x1xf32> -> vector<2x1x1xf32>
    %cst_14 = arith.constant dense<0xFF800000> : vector<2x1xf32>
    %29 = vector.multi_reduction <maximumf>, %22, %cst_14 [2] : vector<2x1x256xf32> to vector<2x1xf32>
    %30 = vector.shape_cast %29 : vector<2x1xf32> to vector<2x1x1xf32>
    %cst_15 = arith.constant 0.000000e+00 : f32
    %31 = vector.broadcast %cst_15 : f32 to vector<2x1x1xf32>
    %cst_16 = arith.constant 1.000000e+00 : f32
    %32 = vector.broadcast %cst_16 : f32 to vector<2x1x1xf32>
    %33 = arith.addf %30, %32 : vector<2x1x1xf32>
    %c0_i32 = arith.constant 0 : i32
    %34 = arith.addf %31, %33 : vector<2x1x1xf32>
    %cst_17 = arith.constant 5.000000e-01 : f32
    %35 = vector.broadcast %cst_17 : f32 to vector<2x1x1xf32>
    %36 = arith.mulf %35, %34 : vector<2x1x1xf32>
    %37 = vector.broadcast %36 : vector<2x1x1xf32> to vector<2x1x256xf32>
    %38 = arith.cmpf oge, %22, %37 : vector<2x1x256xf32>
    %39 = arith.extui %38 : vector<2x1x256xi1> to vector<2x1x256xi32>
    %40 = arith.sitofp %39 : vector<2x1x256xi32> to vector<2x1x256xf32>
    %cst_18 = arith.constant dense<0.000000e+00> : vector<2x1xf32>
    %41 = vector.multi_reduction <add>, %40, %cst_18 [2] : vector<2x1x256xf32> to vector<2x1xf32>
    %42 = vector.shape_cast %41 : vector<2x1xf32> to vector<2x1x1xf32>
    %43 = arith.cmpf oge, %42, %25 : vector<2x1x1xf32>
    %44 = arith.select %43, %36, %31 : vector<2x1x1xi1>, vector<2x1x1xf32>
    %45 = arith.select %43, %33, %36 : vector<2x1x1xi1>, vector<2x1x1xf32>
    %c1_i32 = arith.constant 1 : i32
    %46 = arith.addf %44, %45 : vector<2x1x1xf32>
    %cst_19 = arith.constant 5.000000e-01 : f32
    %47 = vector.broadcast %cst_19 : f32 to vector<2x1x1xf32>
    %48 = arith.mulf %47, %46 : vector<2x1x1xf32>
    %49 = vector.broadcast %48 : vector<2x1x1xf32> to vector<2x1x256xf32>
    %50 = arith.cmpf oge, %22, %49 : vector<2x1x256xf32>
    %51 = arith.extui %50 : vector<2x1x256xi1> to vector<2x1x256xi32>
    %52 = arith.sitofp %51 : vector<2x1x256xi32> to vector<2x1x256xf32>
    %cst_20 = arith.constant dense<0.000000e+00> : vector<2x1xf32>
    %53 = vector.multi_reduction <add>, %52, %cst_20 [2] : vector<2x1x256xf32> to vector<2x1xf32>
    %54 = vector.shape_cast %53 : vector<2x1xf32> to vector<2x1x1xf32>
    %55 = arith.cmpf oge, %54, %25 : vector<2x1x1xf32>
    %56 = arith.select %55, %48, %44 : vector<2x1x1xi1>, vector<2x1x1xf32>
    %57 = arith.select %55, %45, %48 : vector<2x1x1xi1>, vector<2x1x1xf32>
    %c2_i32 = arith.constant 2 : i32
    %58 = arith.addf %56, %57 : vector<2x1x1xf32>
    %cst_21 = arith.constant 5.000000e-01 : f32
    %59 = vector.broadcast %cst_21 : f32 to vector<2x1x1xf32>
    %60 = arith.mulf %59, %58 : vector<2x1x1xf32>
    %61 = vector.broadcast %60 : vector<2x1x1xf32> to vector<2x1x256xf32>
    %62 = arith.cmpf oge, %22, %61 : vector<2x1x256xf32>
    %63 = arith.extui %62 : vector<2x1x256xi1> to vector<2x1x256xi32>
    %64 = arith.sitofp %63 : vector<2x1x256xi32> to vector<2x1x256xf32>
    %cst_22 = arith.constant dense<0.000000e+00> : vector<2x1xf32>
    %65 = vector.multi_reduction <add>, %64, %cst_22 [2] : vector<2x1x256xf32> to vector<2x1xf32>
    %66 = vector.shape_cast %65 : vector<2x1xf32> to vector<2x1x1xf32>
    %67 = arith.cmpf oge, %66, %25 : vector<2x1x1xf32>
    %68 = arith.select %67, %60, %56 : vector<2x1x1xi1>, vector<2x1x1xf32>
    %69 = arith.select %67, %57, %60 : vector<2x1x1xi1>, vector<2x1x1xf32>
    %c3_i32 = arith.constant 3 : i32
    %70 = arith.addf %68, %69 : vector<2x1x1xf32>
    %cst_23 = arith.constant 5.000000e-01 : f32
    %71 = vector.broadcast %cst_23 : f32 to vector<2x1x1xf32>
    %72 = arith.mulf %71, %70 : vector<2x1x1xf32>
    %73 = vector.broadcast %72 : vector<2x1x1xf32> to vector<2x1x256xf32>
    %74 = arith.cmpf oge, %22, %73 : vector<2x1x256xf32>
    %75 = arith.extui %74 : vector<2x1x256xi1> to vector<2x1x256xi32>
    %76 = arith.sitofp %75 : vector<2x1x256xi32> to vector<2x1x256xf32>
    %cst_24 = arith.constant dense<0.000000e+00> : vector<2x1xf32>
    %77 = vector.multi_reduction <add>, %76, %cst_24 [2] : vector<2x1x256xf32> to vector<2x1xf32>
    %78 = vector.shape_cast %77 : vector<2x1xf32> to vector<2x1x1xf32>
    %79 = arith.cmpf oge, %78, %25 : vector<2x1x1xf32>
    %80 = arith.select %79, %72, %68 : vector<2x1x1xi1>, vector<2x1x1xf32>
    %81 = arith.select %79, %69, %72 : vector<2x1x1xi1>, vector<2x1x1xf32>
    %c4_i32 = arith.constant 4 : i32
    %82 = arith.addf %80, %81 : vector<2x1x1xf32>
    %cst_25 = arith.constant 5.000000e-01 : f32
    %83 = vector.broadcast %cst_25 : f32 to vector<2x1x1xf32>
    %84 = arith.mulf %83, %82 : vector<2x1x1xf32>
    %85 = vector.broadcast %84 : vector<2x1x1xf32> to vector<2x1x256xf32>
    %86 = arith.cmpf oge, %22, %85 : vector<2x1x256xf32>
    %87 = arith.extui %86 : vector<2x1x256xi1> to vector<2x1x256xi32>
    %88 = arith.sitofp %87 : vector<2x1x256xi32> to vector<2x1x256xf32>
    %cst_26 = arith.constant dense<0.000000e+00> : vector<2x1xf32>
    %89 = vector.multi_reduction <add>, %88, %cst_26 [2] : vector<2x1x256xf32> to vector<2x1xf32>
    %90 = vector.shape_cast %89 : vector<2x1xf32> to vector<2x1x1xf32>
    %91 = arith.cmpf oge, %90, %25 : vector<2x1x1xf32>
    %92 = arith.select %91, %84, %80 : vector<2x1x1xi1>, vector<2x1x1xf32>
    %93 = arith.select %91, %81, %84 : vector<2x1x1xi1>, vector<2x1x1xf32>
    %c5_i32 = arith.constant 5 : i32
    %94 = arith.addf %92, %93 : vector<2x1x1xf32>
    %cst_27 = arith.constant 5.000000e-01 : f32
    %95 = vector.broadcast %cst_27 : f32 to vector<2x1x1xf32>
    %96 = arith.mulf %95, %94 : vector<2x1x1xf32>
    %97 = vector.broadcast %96 : vector<2x1x1xf32> to vector<2x1x256xf32>
    %98 = arith.cmpf oge, %22, %97 : vector<2x1x256xf32>
    %99 = arith.extui %98 : vector<2x1x256xi1> to vector<2x1x256xi32>
    %100 = arith.sitofp %99 : vector<2x1x256xi32> to vector<2x1x256xf32>
    %cst_28 = arith.constant dense<0.000000e+00> : vector<2x1xf32>
    %101 = vector.multi_reduction <add>, %100, %cst_28 [2] : vector<2x1x256xf32> to vector<2x1xf32>
    %102 = vector.shape_cast %101 : vector<2x1xf32> to vector<2x1x1xf32>
    %103 = arith.cmpf oge, %102, %25 : vector<2x1x1xf32>
    %104 = arith.select %103, %96, %92 : vector<2x1x1xi1>, vector<2x1x1xf32>
    %105 = arith.select %103, %93, %96 : vector<2x1x1xi1>, vector<2x1x1xf32>
    %c6_i32 = arith.constant 6 : i32
    %106 = arith.addf %104, %105 : vector<2x1x1xf32>
    %cst_29 = arith.constant 5.000000e-01 : f32
    %107 = vector.broadcast %cst_29 : f32 to vector<2x1x1xf32>
    %108 = arith.mulf %107, %106 : vector<2x1x1xf32>
    %109 = vector.broadcast %108 : vector<2x1x1xf32> to vector<2x1x256xf32>
    %110 = arith.cmpf oge, %22, %109 : vector<2x1x256xf32>
    %111 = arith.extui %110 : vector<2x1x256xi1> to vector<2x1x256xi32>
    %112 = arith.sitofp %111 : vector<2x1x256xi32> to vector<2x1x256xf32>
    %cst_30 = arith.constant dense<0.000000e+00> : vector<2x1xf32>
    %113 = vector.multi_reduction <add>, %112, %cst_30 [2] : vector<2x1x256xf32> to vector<2x1xf32>
    %114 = vector.shape_cast %113 : vector<2x1xf32> to vector<2x1x1xf32>
    %115 = arith.cmpf oge, %114, %25 : vector<2x1x1xf32>
    %116 = arith.select %115, %108, %104 : vector<2x1x1xi1>, vector<2x1x1xf32>
    %117 = arith.select %115, %105, %108 : vector<2x1x1xi1>, vector<2x1x1xf32>
    %c7_i32 = arith.constant 7 : i32
    %118 = arith.addf %116, %117 : vector<2x1x1xf32>
    %cst_31 = arith.constant 5.000000e-01 : f32
    %119 = vector.broadcast %cst_31 : f32 to vector<2x1x1xf32>
    %120 = arith.mulf %119, %118 : vector<2x1x1xf32>
    %121 = vector.broadcast %120 : vector<2x1x1xf32> to vector<2x1x256xf32>
    %122 = arith.cmpf oge, %22, %121 : vector<2x1x256xf32>
    %123 = arith.extui %122 : vector<2x1x256xi1> to vector<2x1x256xi32>
    %124 = arith.sitofp %123 : vector<2x1x256xi32> to vector<2x1x256xf32>
    %cst_32 = arith.constant dense<0.000000e+00> : vector<2x1xf32>
    %125 = vector.multi_reduction <add>, %124, %cst_32 [2] : vector<2x1x256xf32> to vector<2x1xf32>
    %126 = vector.shape_cast %125 : vector<2x1xf32> to vector<2x1x1xf32>
    %127 = arith.cmpf oge, %126, %25 : vector<2x1x1xf32>
    %128 = arith.select %127, %120, %116 : vector<2x1x1xi1>, vector<2x1x1xf32>
    %129 = arith.select %127, %117, %120 : vector<2x1x1xi1>, vector<2x1x1xf32>
    %c8_i32 = arith.constant 8 : i32
    %130 = arith.addf %128, %129 : vector<2x1x1xf32>
    %cst_33 = arith.constant 5.000000e-01 : f32
    %131 = vector.broadcast %cst_33 : f32 to vector<2x1x1xf32>
    %132 = arith.mulf %131, %130 : vector<2x1x1xf32>
    %133 = vector.broadcast %132 : vector<2x1x1xf32> to vector<2x1x256xf32>
    %134 = arith.cmpf oge, %22, %133 : vector<2x1x256xf32>
    %135 = arith.extui %134 : vector<2x1x256xi1> to vector<2x1x256xi32>
    %136 = arith.sitofp %135 : vector<2x1x256xi32> to vector<2x1x256xf32>
    %cst_34 = arith.constant dense<0.000000e+00> : vector<2x1xf32>
    %137 = vector.multi_reduction <add>, %136, %cst_34 [2] : vector<2x1x256xf32> to vector<2x1xf32>
    %138 = vector.shape_cast %137 : vector<2x1xf32> to vector<2x1x1xf32>
    %139 = arith.cmpf oge, %138, %25 : vector<2x1x1xf32>
    %140 = arith.select %139, %132, %128 : vector<2x1x1xi1>, vector<2x1x1xf32>
    %141 = arith.select %139, %129, %132 : vector<2x1x1xi1>, vector<2x1x1xf32>
    %c9_i32 = arith.constant 9 : i32
    %142 = arith.addf %140, %141 : vector<2x1x1xf32>
    %cst_35 = arith.constant 5.000000e-01 : f32
    %143 = vector.broadcast %cst_35 : f32 to vector<2x1x1xf32>
    %144 = arith.mulf %143, %142 : vector<2x1x1xf32>
    %145 = vector.broadcast %144 : vector<2x1x1xf32> to vector<2x1x256xf32>
    %146 = arith.cmpf oge, %22, %145 : vector<2x1x256xf32>
    %147 = arith.extui %146 : vector<2x1x256xi1> to vector<2x1x256xi32>
    %148 = arith.sitofp %147 : vector<2x1x256xi32> to vector<2x1x256xf32>
    %cst_36 = arith.constant dense<0.000000e+00> : vector<2x1xf32>
    %149 = vector.multi_reduction <add>, %148, %cst_36 [2] : vector<2x1x256xf32> to vector<2x1xf32>
    %150 = vector.shape_cast %149 : vector<2x1xf32> to vector<2x1x1xf32>
    %151 = arith.cmpf oge, %150, %25 : vector<2x1x1xf32>
    %152 = arith.select %151, %144, %140 : vector<2x1x1xi1>, vector<2x1x1xf32>
    %153 = arith.select %151, %141, %144 : vector<2x1x1xi1>, vector<2x1x1xf32>
    %c10_i32 = arith.constant 10 : i32
    %154 = arith.addf %152, %153 : vector<2x1x1xf32>
    %cst_37 = arith.constant 5.000000e-01 : f32
    %155 = vector.broadcast %cst_37 : f32 to vector<2x1x1xf32>
    %156 = arith.mulf %155, %154 : vector<2x1x1xf32>
    %157 = vector.broadcast %156 : vector<2x1x1xf32> to vector<2x1x256xf32>
    %158 = arith.cmpf oge, %22, %157 : vector<2x1x256xf32>
    %159 = arith.extui %158 : vector<2x1x256xi1> to vector<2x1x256xi32>
    %160 = arith.sitofp %159 : vector<2x1x256xi32> to vector<2x1x256xf32>
    %cst_38 = arith.constant dense<0.000000e+00> : vector<2x1xf32>
    %161 = vector.multi_reduction <add>, %160, %cst_38 [2] : vector<2x1x256xf32> to vector<2x1xf32>
    %162 = vector.shape_cast %161 : vector<2x1xf32> to vector<2x1x1xf32>
    %163 = arith.cmpf oge, %162, %25 : vector<2x1x1xf32>
    %164 = arith.select %163, %156, %152 : vector<2x1x1xi1>, vector<2x1x1xf32>
    %165 = arith.select %163, %153, %156 : vector<2x1x1xi1>, vector<2x1x1xf32>
    %c11_i32 = arith.constant 11 : i32
    %166 = arith.addf %164, %165 : vector<2x1x1xf32>
    %cst_39 = arith.constant 5.000000e-01 : f32
    %167 = vector.broadcast %cst_39 : f32 to vector<2x1x1xf32>
    %168 = arith.mulf %167, %166 : vector<2x1x1xf32>
    %169 = vector.broadcast %168 : vector<2x1x1xf32> to vector<2x1x256xf32>
    %170 = arith.cmpf oge, %22, %169 : vector<2x1x256xf32>
    %171 = arith.extui %170 : vector<2x1x256xi1> to vector<2x1x256xi32>
    %172 = arith.sitofp %171 : vector<2x1x256xi32> to vector<2x1x256xf32>
    %cst_40 = arith.constant dense<0.000000e+00> : vector<2x1xf32>
    %173 = vector.multi_reduction <add>, %172, %cst_40 [2] : vector<2x1x256xf32> to vector<2x1xf32>
    %174 = vector.shape_cast %173 : vector<2x1xf32> to vector<2x1x1xf32>
    %175 = arith.cmpf oge, %174, %25 : vector<2x1x1xf32>
    %176 = arith.select %175, %168, %164 : vector<2x1x1xi1>, vector<2x1x1xf32>
    %177 = arith.select %175, %165, %168 : vector<2x1x1xi1>, vector<2x1x1xf32>
    %c12_i32 = arith.constant 12 : i32
    %178 = arith.addf %176, %177 : vector<2x1x1xf32>
    %cst_41 = arith.constant 5.000000e-01 : f32
    %179 = vector.broadcast %cst_41 : f32 to vector<2x1x1xf32>
    %180 = arith.mulf %179, %178 : vector<2x1x1xf32>
    %181 = vector.broadcast %180 : vector<2x1x1xf32> to vector<2x1x256xf32>
    %182 = arith.cmpf oge, %22, %181 : vector<2x1x256xf32>
    %183 = arith.extui %182 : vector<2x1x256xi1> to vector<2x1x256xi32>
    %184 = arith.sitofp %183 : vector<2x1x256xi32> to vector<2x1x256xf32>
    %cst_42 = arith.constant dense<0.000000e+00> : vector<2x1xf32>
    %185 = vector.multi_reduction <add>, %184, %cst_42 [2] : vector<2x1x256xf32> to vector<2x1xf32>
    %186 = vector.shape_cast %185 : vector<2x1xf32> to vector<2x1x1xf32>
    %187 = arith.cmpf oge, %186, %25 : vector<2x1x1xf32>
    %188 = arith.select %187, %180, %176 : vector<2x1x1xi1>, vector<2x1x1xf32>
    %189 = arith.select %187, %177, %180 : vector<2x1x1xi1>, vector<2x1x1xf32>
    %c13_i32 = arith.constant 13 : i32
    %190 = arith.addf %188, %189 : vector<2x1x1xf32>
    %cst_43 = arith.constant 5.000000e-01 : f32
    %191 = vector.broadcast %cst_43 : f32 to vector<2x1x1xf32>
    %192 = arith.mulf %191, %190 : vector<2x1x1xf32>
    %193 = vector.broadcast %192 : vector<2x1x1xf32> to vector<2x1x256xf32>
    %194 = arith.cmpf oge, %22, %193 : vector<2x1x256xf32>
    %195 = arith.extui %194 : vector<2x1x256xi1> to vector<2x1x256xi32>
    %196 = arith.sitofp %195 : vector<2x1x256xi32> to vector<2x1x256xf32>
    %cst_44 = arith.constant dense<0.000000e+00> : vector<2x1xf32>
    %197 = vector.multi_reduction <add>, %196, %cst_44 [2] : vector<2x1x256xf32> to vector<2x1xf32>
    %198 = vector.shape_cast %197 : vector<2x1xf32> to vector<2x1x1xf32>
    %199 = arith.cmpf oge, %198, %25 : vector<2x1x1xf32>
    %200 = arith.select %199, %192, %188 : vector<2x1x1xi1>, vector<2x1x1xf32>
    %201 = arith.select %199, %189, %192 : vector<2x1x1xi1>, vector<2x1x1xf32>
    %c14_i32 = arith.constant 14 : i32
    %202 = arith.addf %200, %201 : vector<2x1x1xf32>
    %cst_45 = arith.constant 5.000000e-01 : f32
    %203 = vector.broadcast %cst_45 : f32 to vector<2x1x1xf32>
    %204 = arith.mulf %203, %202 : vector<2x1x1xf32>
    %205 = vector.broadcast %204 : vector<2x1x1xf32> to vector<2x1x256xf32>
    %206 = arith.cmpf oge, %22, %205 : vector<2x1x256xf32>
    %207 = arith.extui %206 : vector<2x1x256xi1> to vector<2x1x256xi32>
    %208 = arith.sitofp %207 : vector<2x1x256xi32> to vector<2x1x256xf32>
    %cst_46 = arith.constant dense<0.000000e+00> : vector<2x1xf32>
    %209 = vector.multi_reduction <add>, %208, %cst_46 [2] : vector<2x1x256xf32> to vector<2x1xf32>
    %210 = vector.shape_cast %209 : vector<2x1xf32> to vector<2x1x1xf32>
    %211 = arith.cmpf oge, %210, %25 : vector<2x1x1xf32>
    %212 = arith.select %211, %204, %200 : vector<2x1x1xi1>, vector<2x1x1xf32>
    %213 = arith.select %211, %201, %204 : vector<2x1x1xi1>, vector<2x1x1xf32>
    %c15_i32 = arith.constant 15 : i32
    %214 = arith.addf %212, %213 : vector<2x1x1xf32>
    %cst_47 = arith.constant 5.000000e-01 : f32
    %215 = vector.broadcast %cst_47 : f32 to vector<2x1x1xf32>
    %216 = arith.mulf %215, %214 : vector<2x1x1xf32>
    %217 = vector.broadcast %216 : vector<2x1x1xf32> to vector<2x1x256xf32>
    %218 = arith.cmpf oge, %22, %217 : vector<2x1x256xf32>
    %219 = arith.extui %218 : vector<2x1x256xi1> to vector<2x1x256xi32>
    %220 = arith.sitofp %219 : vector<2x1x256xi32> to vector<2x1x256xf32>
    %cst_48 = arith.constant dense<0.000000e+00> : vector<2x1xf32>
    %221 = vector.multi_reduction <add>, %220, %cst_48 [2] : vector<2x1x256xf32> to vector<2x1xf32>
    %222 = vector.shape_cast %221 : vector<2x1xf32> to vector<2x1x1xf32>
    %223 = arith.cmpf oge, %222, %25 : vector<2x1x1xf32>
    %224 = arith.select %223, %216, %212 : vector<2x1x1xi1>, vector<2x1x1xf32>
    %225 = arith.select %223, %213, %216 : vector<2x1x1xi1>, vector<2x1x1xf32>
    %c16_i32 = arith.constant 16 : i32
    %226 = arith.addf %224, %225 : vector<2x1x1xf32>
    %cst_49 = arith.constant 5.000000e-01 : f32
    %227 = vector.broadcast %cst_49 : f32 to vector<2x1x1xf32>
    %228 = arith.mulf %227, %226 : vector<2x1x1xf32>
    %229 = vector.broadcast %228 : vector<2x1x1xf32> to vector<2x1x256xf32>
    %230 = arith.cmpf oge, %22, %229 : vector<2x1x256xf32>
    %231 = arith.extui %230 : vector<2x1x256xi1> to vector<2x1x256xi32>
    %232 = arith.sitofp %231 : vector<2x1x256xi32> to vector<2x1x256xf32>
    %cst_50 = arith.constant dense<0.000000e+00> : vector<2x1xf32>
    %233 = vector.multi_reduction <add>, %232, %cst_50 [2] : vector<2x1x256xf32> to vector<2x1xf32>
    %234 = vector.shape_cast %233 : vector<2x1xf32> to vector<2x1x1xf32>
    %235 = arith.cmpf oge, %234, %25 : vector<2x1x1xf32>
    %236 = arith.select %235, %228, %224 : vector<2x1x1xi1>, vector<2x1x1xf32>
    %237 = arith.select %235, %225, %228 : vector<2x1x1xi1>, vector<2x1x1xf32>
    %c17_i32 = arith.constant 17 : i32
    %238 = arith.addf %236, %237 : vector<2x1x1xf32>
    %cst_51 = arith.constant 5.000000e-01 : f32
    %239 = vector.broadcast %cst_51 : f32 to vector<2x1x1xf32>
    %240 = arith.mulf %239, %238 : vector<2x1x1xf32>
    %241 = vector.broadcast %240 : vector<2x1x1xf32> to vector<2x1x256xf32>
    %242 = arith.cmpf oge, %22, %241 : vector<2x1x256xf32>
    %243 = arith.extui %242 : vector<2x1x256xi1> to vector<2x1x256xi32>
    %244 = arith.sitofp %243 : vector<2x1x256xi32> to vector<2x1x256xf32>
    %cst_52 = arith.constant dense<0.000000e+00> : vector<2x1xf32>
    %245 = vector.multi_reduction <add>, %244, %cst_52 [2] : vector<2x1x256xf32> to vector<2x1xf32>
    %246 = vector.shape_cast %245 : vector<2x1xf32> to vector<2x1x1xf32>
    %247 = arith.cmpf oge, %246, %25 : vector<2x1x1xf32>
    %248 = arith.select %247, %240, %236 : vector<2x1x1xi1>, vector<2x1x1xf32>
    %249 = arith.select %247, %237, %240 : vector<2x1x1xi1>, vector<2x1x1xf32>
    %c18_i32 = arith.constant 18 : i32
    %250 = arith.addf %248, %249 : vector<2x1x1xf32>
    %cst_53 = arith.constant 5.000000e-01 : f32
    %251 = vector.broadcast %cst_53 : f32 to vector<2x1x1xf32>
    %252 = arith.mulf %251, %250 : vector<2x1x1xf32>
    %253 = vector.broadcast %252 : vector<2x1x1xf32> to vector<2x1x256xf32>
    %254 = arith.cmpf oge, %22, %253 : vector<2x1x256xf32>
    %255 = arith.extui %254 : vector<2x1x256xi1> to vector<2x1x256xi32>
    %256 = arith.sitofp %255 : vector<2x1x256xi32> to vector<2x1x256xf32>
    %cst_54 = arith.constant dense<0.000000e+00> : vector<2x1xf32>
    %257 = vector.multi_reduction <add>, %256, %cst_54 [2] : vector<2x1x256xf32> to vector<2x1xf32>
    %258 = vector.shape_cast %257 : vector<2x1xf32> to vector<2x1x1xf32>
    %259 = arith.cmpf oge, %258, %25 : vector<2x1x1xf32>
    %260 = arith.select %259, %252, %248 : vector<2x1x1xi1>, vector<2x1x1xf32>
    %261 = arith.select %259, %249, %252 : vector<2x1x1xi1>, vector<2x1x1xf32>
    %c19_i32 = arith.constant 19 : i32
    %262 = arith.addf %260, %261 : vector<2x1x1xf32>
    %cst_55 = arith.constant 5.000000e-01 : f32
    %263 = vector.broadcast %cst_55 : f32 to vector<2x1x1xf32>
    %264 = arith.mulf %263, %262 : vector<2x1x1xf32>
    %265 = vector.broadcast %264 : vector<2x1x1xf32> to vector<2x1x256xf32>
    %266 = arith.cmpf oge, %22, %265 : vector<2x1x256xf32>
    %267 = arith.extui %266 : vector<2x1x256xi1> to vector<2x1x256xi32>
    %268 = arith.sitofp %267 : vector<2x1x256xi32> to vector<2x1x256xf32>
    %cst_56 = arith.constant dense<0.000000e+00> : vector<2x1xf32>
    %269 = vector.multi_reduction <add>, %268, %cst_56 [2] : vector<2x1x256xf32> to vector<2x1xf32>
    %270 = vector.shape_cast %269 : vector<2x1xf32> to vector<2x1x1xf32>
    %271 = arith.cmpf oge, %270, %25 : vector<2x1x1xf32>
    %272 = arith.select %271, %264, %260 : vector<2x1x1xi1>, vector<2x1x1xf32>
    %273 = arith.select %271, %261, %264 : vector<2x1x1xi1>, vector<2x1x1xf32>
    %274 = vector.broadcast %272 : vector<2x1x1xf32> to vector<2x1x256xf32>
    %275 = arith.cmpf oge, %22, %274 : vector<2x1x256xf32>
    %276 = arith.extui %275 : vector<2x1x256xi1> to vector<2x1x256xi32>
    %277 = arith.sitofp %276 : vector<2x1x256xi32> to vector<2x1x256xf32>
    %cst_57 = arith.constant dense<0.000000e+00> : vector<2x1xf32>
    %278 = vector.multi_reduction <add>, %277, %cst_57 [2] : vector<2x1x256xf32> to vector<2x1xf32>
    %279 = vector.shape_cast %278 : vector<2x1xf32> to vector<2x1x1xf32>
    %280 = arith.mulf %22, %277 : vector<2x1x256xf32>
    %cst_58 = arith.constant dense<0.000000e+00> : vector<2x1xf32>
    %281 = vector.multi_reduction <add>, %280, %cst_58 [2] : vector<2x1x256xf32> to vector<2x1xf32>
    %282 = vector.shape_cast %281 : vector<2x1xf32> to vector<2x1x1xf32>
    %283 = arith.subf %279, %25 : vector<2x1x1xf32>
    %284 = arith.mulf %283, %272 : vector<2x1x1xf32>
    %285 = arith.subf %282, %284 : vector<2x1x1xf32>
    %286 = arith.mulf %285, %28 : vector<2x1x1xf32>
    %287 = vector.extract_strided_slice %286 {offsets = [0, 0, 0], sizes = [1, 1, 1], strides = [1, 1, 1]} : vector<2x1x1xf32> to vector<1x1x1xf32>
    %288 = vector.shape_cast %287 : vector<1x1x1xf32> to vector<1x1xf32>
    %cst_59 = arith.constant 5.000000e-01 : f32
    %289 = vector.broadcast %cst_59 : f32 to vector<1x1xf32>
    %290 = arith.mulf %289, %288 : vector<1x1xf32>
    %291 = vector.extract_strided_slice %286 {offsets = [1, 0, 0], sizes = [1, 1, 1], strides = [1, 1, 1]} : vector<2x1x1xf32> to vector<1x1x1xf32>
    %292 = vector.shape_cast %291 : vector<1x1x1xf32> to vector<1x1xf32>
    %cst_60 = arith.constant 5.000000e-01 : f32
    %293 = vector.broadcast %cst_60 : f32 to vector<1x1xf32>
    %294 = arith.mulf %293, %292 : vector<1x1xf32>
    %295 = arith.addf %290, %294 : vector<1x1xf32>
    %296 = vector.shape_cast %295 : vector<1x1xf32> to vector<1x1x1xf32>
    %c0_61 = arith.constant 0 : index
    %c0_62 = arith.constant 0 : index
    %c0_63 = arith.constant 0 : index
    %297 = vector.load %arg5[%c0_61, %c0_62, %c0_63] : memref<1x1x1xf32, #tpu.memory_space<vmem>>, vector<1x1x1xf32>
    tpu.vector_store %arg5[%c0_61, %c0_62, %c0_63], %296 {strides = array<i32>} : memref<1x1x1xf32, #tpu.memory_space<vmem>>, vector<1x1x1xf32>,
    return
  }
  func.func @transform_0(%arg0: i32) -> (i32, i32, i32) {
    %c0_i32 = arith.constant 0 : i32
    %c0_i32_0 = arith.constant 0 : i32
    %c0_i32_1 = arith.constant 0 : i32
    return %arg0, %c0_i32, %c0_i32_0 : i32, i32, i32
  }
  func.func @transform_1(%arg0: i32) -> (i32, i32, i32) {
    %c0_i32 = arith.constant 0 : i32
    %c0_i32_0 = arith.constant 0 : i32
    %c0_i32_1 = arith.constant 0 : i32
    return %arg0, %c0_i32, %c0_i32_0 : i32, i32, i32
  }
  func.func @transform_2(%arg0: i32) -> (i32, i32) {
    %c0_i32 = arith.constant 0 : i32
    %c0_i32_0 = arith.constant 0 : i32
    %c0_i32_1 = arith.constant 0 : i32
    return %c0_i32, %c0_i32_0 : i32, i32
  }
  func.func @transform_3(%arg0: i32) -> i32 {
    %c0_i32 = arith.constant 0 : i32
    %c0_i32_0 = arith.constant 0 : i32
    return %c0_i32 : i32
  }
  func.func @transform_4(%arg0: i32) -> (i32, i32, i32) {
    %c0_i32 = arith.constant 0 : i32
    %c0_i32_0 = arith.constant 0 : i32
    %c0_i32_1 = arith.constant 0 : i32
    return %arg0, %c0_i32, %c0_i32_0 : i32, i32, i32
  }
}

</mosaic_0001>

<llo_original>
// kernel: tpu_custom_call.1
$region0: #{tpu_custom_call.1}
  #allocation0 [shape = 'u32[]', space=smem, size = 0x4, offset = 0x4, fixed_abs, tag = 'smem constant byte address 0x4 - core index']
  #allocation1 [shape = 'u32[144,128]{1,0:T(1,128)}', space=vmem, size = 0x12000, scoped, tag = 'internal scratch']
  #allocation2 [shape = 'f32[1]{0:T(128)S(6)}', space=smem, size = 0x200, scoped, tag = 'scoped memory for tpu_custom_call.1']
  %s0 = inlined_call_operand.vmem [shape: f32[2,512,256], index: 0, kind: input, shape index: {}]
  %s1 = inlined_call_operand.vmem [shape: f32[2,512,64], index: 1, kind: input, shape index: {}]
  %s2 = inlined_call_operand.vmem [shape: f32[512,1], index: 2, kind: input, shape index: {}]
  %s3 = inlined_call_operand.<no memory space> [shape: f32[1], index: 3, kind: input, shape index: {}]
  %s4 = inlined_call_operand.vmem [shape: f32[2,1,1], index: 4, kind: output, shape index: {}]
  %s5 = sld [smem:[#allocation0]]
  $region49: #{tpu_custom_call.1} parent=0
    _
  %s7 = ssub.s32 1, %s5
  %s8 = scalar_select 0, %s7, %s5
  %9 = sst [smem:[#allocation2]] %s3
  loop: start=0, step=1, limit=4
  $region2: #{tpu_custom_call.1} parent=0 // loop_pre_header
    _
  $region3: #{tpu_custom_call.1} parent=0 // loop_header
    %s11 = sphi 0, %s15
    %p12 = scmp.ge.s32.totalorder %s11, 4
    %s21 = sphi 0, %s23
    %s24 = sphi 0, %s21
    %s25 = sphi 0, %s24
    %s41 = sphi 0, %s25
    %s47 = sphi 0, %s49
    %s50 = sphi 0, %s47
    %s51 = sphi 0, %s50
    %s67 = sphi 0, %s51
    %s71 = sphi 0, %s71
    %s73 = sphi 0, %s71
    %s74 = sphi 0, %s73
    %s88 = sphi 0, %s74
    %s92 = sphi 0, %s92
    %s94 = sphi 0, %s92
    %s95 = sphi 0, %s94
    %s109 = sphi 0, %s95
    %s115 = sphi 0, %s117
    %s118 = sphi 0, %s115
    %s119 = sphi 0, %s118
    %s135 = sphi 0, %s119
  $region4: #{tpu_custom_call.1} parent=0 // loop_header_branch
    %14 = sbr.rel (%p12) target = $region8
  $region5: #{tpu_custom_call.1} parent=0 // loop_body
    %s16 = ssub.s32 %s11, 1
    %s17 = ssub.s32 %s11, 2
    %s18 = sadd.s32 %s11, 1
    %s19 = ssub.s32 %s11, %s18
    %p20 = scmp.eq.s32.totalorder %s19, 0
    %s22 = sadd.s32 %s21, 1
    %s23 = scalar_select %p20, %s21, %s22
    %p26 = pneg %p20
    %p27 = scmp.eq.s32.totalorder %s11, 1
    %p28 = por %p26, %p27
    %p29 = scmp.ne.s32.totalorder %s21, %s24
    %p30 = scmp.eq.s32.totalorder %s11, 0
    %p31 = por %p29, %p30
    %p32 = scmp.ne.s32.totalorder %s21, %s24
    %p33 = scmp.eq.s32.totalorder %s16, 1
    %p34 = por %p32, %p33
    %p35 = scmp.ne.s32.totalorder %s24, %s25
    %p36 = scmp.eq.s32.totalorder %s16, 0
    %p37 = por %p35, %p36
    %p38 = scmp.ne.s32.totalorder %s24, %s25
    %p39 = scmp.eq.s32.totalorder %s17, 1
    %p40 = por %p38, %p39
    %p42 = scmp.ne.s32.totalorder %s25, %s41
    %p43 = scmp.eq.s32.totalorder %s17, 0
    %p44 = por %p42, %p43
    %s45 = ssub.s32 %s11, %s18
    %p46 = scmp.eq.s32.totalorder %s45, 0
    %s48 = sadd.s32 %s47, 1
    %s49 = scalar_select %p46, %s47, %s48
    %p52 = pneg %p46
    %p53 = scmp.eq.s32.totalorder %s11, 1
    %p54 = por %p52, %p53
    %p55 = scmp.ne.s32.totalorder %s47, %s50
    %p56 = scmp.eq.s32.totalorder %s11, 0
    %p57 = por %p55, %p56
    %p58 = scmp.ne.s32.totalorder %s47, %s50
    %p59 = scmp.eq.s32.totalorder %s16, 1
    %p60 = por %p58, %p59
    %p61 = scmp.ne.s32.totalorder %s50, %s51
    %p62 = scmp.eq.s32.totalorder %s16, 0
    %p63 = por %p61, %p62
    %p64 = scmp.ne.s32.totalorder %s50, %s51
    %p65 = scmp.eq.s32.totalorder %s17, 1
    %p66 = por %p64, %p65
    %p68 = scmp.ne.s32.totalorder %s51, %s67
    %p69 = scmp.eq.s32.totalorder %s17, 0
    %p70 = por %p68, %p69
    %s72 = sadd.s32 %s71, 1
    %p75 = scmp.eq.s32.totalorder %s11, 1
    %p76 = scmp.ne.s32.totalorder %s71, %s73
    %p77 = scmp.eq.s32.totalorder %s11, 0
    %p78 = por %p76, %p77
    %p79 = scmp.ne.s32.totalorder %s71, %s73
    %p80 = scmp.eq.s32.totalorder %s16, 1
    %p81 = por %p79, %p80
    %p82 = scmp.ne.s32.totalorder %s73, %s74
    %p83 = scmp.eq.s32.totalorder %s16, 0
    %p84 = por %p82, %p83
    %p85 = scmp.ne.s32.totalorder %s73, %s74
    %p86 = scmp.eq.s32.totalorder %s17, 1
    %p87 = por %p85, %p86
    %p89 = scmp.ne.s32.totalorder %s74, %s88
    %p90 = scmp.eq.s32.totalorder %s17, 0
    %p91 = por %p89, %p90
    %s93 = sadd.s32 %s92, 1
    %p96 = scmp.eq.s32.totalorder %s11, 1
    %p97 = scmp.ne.s32.totalorder %s92, %s94
    %p98 = scmp.eq.s32.totalorder %s11, 0
    %p99 = por %p97, %p98
    %p100 = scmp.ne.s32.totalorder %s92, %s94
    %p101 = scmp.eq.s32.totalorder %s16, 1
    %p102 = por %p100, %p101
    %p103 = scmp.ne.s32.totalorder %s94, %s95
    %p104 = scmp.eq.s32.totalorder %s16, 0
    %p105 = por %p103, %p104
    %p106 = scmp.ne.s32.totalorder %s94, %s95
    %p107 = scmp.eq.s32.totalorder %s17, 1
    %p108 = por %p106, %p107
    %p110 = scmp.ne.s32.totalorder %s95, %s109
    %p111 = scmp.eq.s32.totalorder %s17, 0
    %p112 = por %p110, %p111
    %s113 = ssub.s32 %s11, %s18
    %p114 = scmp.eq.s32.totalorder %s113, 0
    %s116 = sadd.s32 %s115, 1
    %s117 = scalar_select %p114, %s115, %s116
    %p120 = pneg %p114
    %p121 = scmp.eq.s32.totalorder %s11, 1
    %p122 = por %p120, %p121
    %p123 = scmp.ne.s32.totalorder %s115, %s118
    %p124 = scmp.eq.s32.totalorder %s11, 0
    %p125 = por %p123, %p124
    %p126 = scmp.ne.s32.totalorder %s115, %s118
    %p127 = scmp.eq.s32.totalorder %s16, 1
    %p128 = por %p126, %p127
    %p129 = scmp.ne.s32.totalorder %s118, %s119
    %p130 = scmp.eq.s32.totalorder %s16, 0
    %p131 = por %p129, %p130
    %p132 = scmp.ne.s32.totalorder %s118, %s119
    %p133 = scmp.eq.s32.totalorder %s17, 1
    %p134 = por %p132, %p133
    %p136 = scmp.ne.s32.totalorder %s119, %s135
    %p137 = scmp.eq.s32.totalorder %s17, 0
    %p138 = por %p136, %p137
    %p139 = scmp.le.s32.totalorder 1, %s11
    %p140 = scmp.lt.s32.totalorder %s11, 3
    %p141 = pnand %p139, %p140
    %p142 = pneg %p141
    // Predicated region
    $region9: #{tpu_custom_call.1} parent=5 // pred_check
      _
    $region10: #{tpu_custom_call.1} parent=5 // pred_check_branch
      %144 = sbr.rel (%p141) target = $region12
    $region11: #{tpu_custom_call.1} parent=5 // pred_region
      %s145 = ssub.s32 %s11, 1
      // Predicated region
      $region13: #{tpu_custom_call.1} parent=11 // pred_check
        %p146 = pneg %p84
      $region14: #{tpu_custom_call.1} parent=11 // pred_check_branch
        %148 = sbr.rel (%p146) target = $region16
      $region15: #{tpu_custom_call.1} parent=11 // pred_region
        _
      $region16: #{tpu_custom_call.1} parent=11 // pred_fallthru
        _
      // Predicated region
      $region17: #{tpu_custom_call.1} parent=11 // pred_check
        %p149 = pneg %p105
      $region18: #{tpu_custom_call.1} parent=11 // pred_check_branch
        %151 = sbr.rel (%p149) target = $region20
      $region19: #{tpu_custom_call.1} parent=11 // pred_region
        _
      $region20: #{tpu_custom_call.1} parent=11 // pred_fallthru
        _
    $region12: #{tpu_custom_call.1} parent=5 // pred_fallthru
      _
    %p152 = scmp.lt.s32.totalorder %s11, 2
    // Predicated region
    $region21: #{tpu_custom_call.1} parent=5 // pred_check
      %p153 = pneg %p152
    $region22: #{tpu_custom_call.1} parent=5 // pred_check_branch
      %155 = sbr.rel (%p153) target = $region24
    $region23: #{tpu_custom_call.1} parent=5 // pred_region
      // Predicated region
      $region25: #{tpu_custom_call.1} parent=23 // pred_check
        %p156 = pneg %p31
      $region26: #{tpu_custom_call.1} parent=23 // pred_check_branch
        %158 = sbr.rel (%p156) target = $region28
      $region27: #{tpu_custom_call.1} parent=23 // pred_region
        %p159 = scmp.lt.s32.totalorder %s11, 1
        %s160 = scalar_select %p159, %s11, 1
        %s161 = smul.addr %s160, 128
        %s162 = smul.addr %s161, 8
        %s163 = scalar_lea.vmem %s0, %s162
      $region28: #{tpu_custom_call.1} parent=23 // pred_fallthru
        _
      // Predicated region
      $region29: #{tpu_custom_call.1} parent=23 // pred_check
        %p164 = pneg %p57
      $region30: #{tpu_custom_call.1} parent=23 // pred_check_branch
        %166 = sbr.rel (%p164) target = $region32
      $region31: #{tpu_custom_call.1} parent=23 // pred_region
        %p167 = scmp.lt.s32.totalorder %s11, 1
        %s168 = scalar_select %p167, %s11, 1
        %s169 = smul.addr %s168, 64
        %s170 = smul.addr %s169, 8
        %s171 = scalar_lea.vmem %s1, %s170
      $region32: #{tpu_custom_call.1} parent=23 // pred_fallthru
        _
    $region24: #{tpu_custom_call.1} parent=5 // pred_fallthru
      _
    %p172 = scmp.le.s32.totalorder 1, %s11
    %p173 = scmp.lt.s32.totalorder %s11, 3
    %p174 = pnand %p172, %p173
    %p175 = pneg %p174
    // Predicated region
    $region33: #{tpu_custom_call.1} parent=5 // pred_check
      _
    $region34: #{tpu_custom_call.1} parent=5 // pred_check_branch
      %177 = sbr.rel (%p174) target = $region36
    $region35: #{tpu_custom_call.1} parent=5 // pred_region
      %s178 = ssub.s32 %s11, 1
      %p179 = scmp.lt.s32.totalorder %s16, 1
      %s180 = scalar_select %p179, %s16, 1
      %s181 = smul.addr %s180, 128
      %s182 = smul.addr %s181, 8
      %s183 = scalar_lea.vmem %s0, %s182
      %p184 = pneg %p37
      %p185 = pneg %p34
      %p186 = scmp.lt.s32.totalorder %s16, 1
      %s187 = scalar_select %p186, %s16, 1
      %s188 = smul.addr %s187, 64
      %s189 = smul.addr %s188, 8
      %s190 = scalar_lea.vmem %s1, %s189
      %p191 = pneg %p63
      %p192 = pneg %p60
      %p193 = pneg %p84
      %p194 = pneg %p81
      %p195 = pneg %p105
      %p196 = pneg %p102
      %p197 = pneg %p131
      %p198 = pneg %p128
      %p199 = scmp.lt.s32.totalorder %s16, 1
      %s200 = scalar_select %p199, %s16, 1
      %s201 = scalar_lea.vmem %s4, %s200
      %p202 = scmp.lt.s32.totalorder %s16, 1
      %s203 = scalar_select %p202, %s16, 1
      %s204 = smul.addr %s203, 128
      %s205 = smul.addr %s204, 8
      %s206 = scalar_lea.vmem %s0, %s205
      %p207 = scmp.lt.s32.totalorder %s16, 1
      %s208 = scalar_select %p207, %s16, 1
      %s209 = smul.addr %s208, 64
      %s210 = smul.addr %s209, 8
      %s211 = scalar_lea.vmem %s1, %s210
      %p212 = scmp.lt.s32.totalorder %s16, 1
      %s213 = scalar_select %p212, %s16, 1
      %s214 = scalar_lea.vmem %s4, %s213
      %v215 = vld [vmem:[%s2] sm:$0xff]
      %v216 = vld [vmem:[%s2 + $0x8] sm:$0xff]
      %v217 = vld [vmem:[%s2 + $0x10] sm:$0xff]
      %v218 = vld [vmem:[%s2 + $0x18] sm:$0xff]
      %v219 = vld [vmem:[%s2 + $0x20] sm:$0xff]
      %v220 = vld [vmem:[%s2 + $0x28] sm:$0xff]
      %v221 = vld [vmem:[%s2 + $0x30] sm:$0xff]
      %v222 = vld [vmem:[%s2 + $0x38] sm:$0xff]
      %v223 = vld [vmem:[%s2 + $0x40] sm:$0xff]
      %v224 = vld [vmem:[%s2 + $0x48] sm:$0xff]
      %v225 = vld [vmem:[%s2 + $0x50] sm:$0xff]
      %v226 = vld [vmem:[%s2 + $0x58] sm:$0xff]
      %v227 = vld [vmem:[%s2 + $0x60] sm:$0xff]
      %v228 = vld [vmem:[%s2 + $0x68] sm:$0xff]
      %v229 = vld [vmem:[%s2 + $0x70] sm:$0xff]
      %v230 = vld [vmem:[%s2 + $0x78] sm:$0xff]
      %v231 = vld [vmem:[%s2 + $0x80] sm:$0xff]
      %v232 = vld [vmem:[%s2 + $0x88] sm:$0xff]
      %v233 = vld [vmem:[%s2 + $0x90] sm:$0xff]
      %v234 = vld [vmem:[%s2 + $0x98] sm:$0xff]
      %v235 = vld [vmem:[%s2 + $0xa0] sm:$0xff]
      %v236 = vld [vmem:[%s2 + $0xa8] sm:$0xff]
      %v237 = vld [vmem:[%s2 + $0xb0] sm:$0xff]
      %v238 = vld [vmem:[%s2 + $0xb8] sm:$0xff]
      %v239 = vld [vmem:[%s2 + $0xc0] sm:$0xff]
      %v240 = vld [vmem:[%s2 + $0xc8] sm:$0xff]
      %v241 = vld [vmem:[%s2 + $0xd0] sm:$0xff]
      %v242 = vld [vmem:[%s2 + $0xd8] sm:$0xff]
      %v243 = vld [vmem:[%s2 + $0xe0] sm:$0xff]
      %v244 = vld [vmem:[%s2 + $0xe8] sm:$0xff]
      %v245 = vld [vmem:[%s2 + $0xf0] sm:$0xff]
      %v246 = vld [vmem:[%s2 + $0xf8] sm:$0xff]
      %v247 = vld [vmem:[%s2 + $0x100] sm:$0xff]
      %v248 = vld [vmem:[%s2 + $0x108] sm:$0xff]
      %v249 = vld [vmem:[%s2 + $0x110] sm:$0xff]
      %v250 = vld [vmem:[%s2 + $0x118] sm:$0xff]
      %v251 = vld [vmem:[%s2 + $0x120] sm:$0xff]
      %v252 = vld [vmem:[%s2 + $0x128] sm:$0xff]
      %v253 = vld [vmem:[%s2 + $0x130] sm:$0xff]
      %v254 = vld [vmem:[%s2 + $0x138] sm:$0xff]
      %v255 = vld [vmem:[%s2 + $0x140] sm:$0xff]
      %v256 = vld [vmem:[%s2 + $0x148] sm:$0xff]
      %v257 = vld [vmem:[%s2 + $0x150] sm:$0xff]
      %v258 = vld [vmem:[%s2 + $0x158] sm:$0xff]
      %v259 = vld [vmem:[%s2 + $0x160] sm:$0xff]
      %v260 = vld [vmem:[%s2 + $0x168] sm:$0xff]
      %v261 = vld [vmem:[%s2 + $0x170] sm:$0xff]
      %v262 = vld [vmem:[%s2 + $0x178] sm:$0xff]
      %v263 = vld [vmem:[%s2 + $0x180] sm:$0xff]
      %v264 = vld [vmem:[%s2 + $0x188] sm:$0xff]
      %v265 = vld [vmem:[%s2 + $0x190] sm:$0xff]
      %v266 = vld [vmem:[%s2 + $0x198] sm:$0xff]
      %v267 = vld [vmem:[%s2 + $0x1a0] sm:$0xff]
      %v268 = vld [vmem:[%s2 + $0x1a8] sm:$0xff]
      %v269 = vld [vmem:[%s2 + $0x1b0] sm:$0xff]
      %v270 = vld [vmem:[%s2 + $0x1b8] sm:$0xff]
      %v271 = vld [vmem:[%s2 + $0x1c0] sm:$0xff]
      %v272 = vld [vmem:[%s2 + $0x1c8] sm:$0xff]
      %v273 = vld [vmem:[%s2 + $0x1d0] sm:$0xff]
      %v274 = vld [vmem:[%s2 + $0x1d8] sm:$0xff]
      %v275 = vld [vmem:[%s2 + $0x1e0] sm:$0xff]
      %v276 = vld [vmem:[%s2 + $0x1e8] sm:$0xff]
      %v277 = vld [vmem:[%s2 + $0x1f0] sm:$0xff]
      %v278 = vld [vmem:[%s2 + $0x1f8] sm:$0xff]
      %s279 = sld [smem:[#allocation2]]
      %v280 = vld [vmem:[%s206] sm:$0xff]
      %v281 = vld [vmem:[%s206 + $0x8] sm:$0xff]
      %v282 = vld [vmem:[%s206 + $0x10] sm:$0xff]
      %v283 = vld [vmem:[%s206 + $0x18] sm:$0xff]
      %v284 = vld [vmem:[%s206 + $0x20] sm:$0xff]
      %v285 = vld [vmem:[%s206 + $0x28] sm:$0xff]
      %v286 = vld [vmem:[%s206 + $0x30] sm:$0xff]
      %v287 = vld [vmem:[%s206 + $0x38] sm:$0xff]
      %v288 = vld [vmem:[%s206 + $0x40] sm:$0xff]
      %v289 = vld [vmem:[%s206 + $0x48] sm:$0xff]
      %v290 = vld [vmem:[%s206 + $0x50] sm:$0xff]
      %v291 = vld [vmem:[%s206 + $0x58] sm:$0xff]
      %v292 = vld [vmem:[%s206 + $0x60] sm:$0xff]
      %v293 = vld [vmem:[%s206 + $0x68] sm:$0xff]
      %v294 = vld [vmem:[%s206 + $0x70] sm:$0xff]
      %v295 = vld [vmem:[%s206 + $0x78] sm:$0xff]
      %v296 = vld [vmem:[%s206 + $0x80] sm:$0xff]
      %v297 = vld [vmem:[%s206 + $0x88] sm:$0xff]
      %v298 = vld [vmem:[%s206 + $0x90] sm:$0xff]
      %v299 = vld [vmem:[%s206 + $0x98] sm:$0xff]
      %v300 = vld [vmem:[%s206 + $0xa0] sm:$0xff]
      %v301 = vld [vmem:[%s206 + $0xa8] sm:$0xff]
      %v302 = vld [vmem:[%s206 + $0xb0] sm:$0xff]
      %v303 = vld [vmem:[%s206 + $0xb8] sm:$0xff]
      %v304 = vld [vmem:[%s206 + $0xc0] sm:$0xff]
      %v305 = vld [vmem:[%s206 + $0xc8] sm:$0xff]
      %v306 = vld [vmem:[%s206 + $0xd0] sm:$0xff]
      %v307 = vld [vmem:[%s206 + $0xd8] sm:$0xff]
      %v308 = vld [vmem:[%s206 + $0xe0] sm:$0xff]
      %v309 = vld [vmem:[%s206 + $0xe8] sm:$0xff]
      %v310 = vld [vmem:[%s206 + $0xf0] sm:$0xff]
      %v311 = vld [vmem:[%s206 + $0xf8] sm:$0xff]
      %v312 = vld [vmem:[%s206 + $0x100] sm:$0xff]
      %v313 = vld [vmem:[%s206 + $0x108] sm:$0xff]
      %v314 = vld [vmem:[%s206 + $0x110] sm:$0xff]
      %v315 = vld [vmem:[%s206 + $0x118] sm:$0xff]
      %v316 = vld [vmem:[%s206 + $0x120] sm:$0xff]
      %v317 = vld [vmem:[%s206 + $0x128] sm:$0xff]
      %v318 = vld [vmem:[%s206 + $0x130] sm:$0xff]
      %v319 = vld [vmem:[%s206 + $0x138] sm:$0xff]
      %v320 = vld [vmem:[%s206 + $0x140] sm:$0xff]
      %v321 = vld [vmem:[%s206 + $0x148] sm:$0xff]
      %v322 = vld [vmem:[%s206 + $0x150] sm:$0xff]
      %v323 = vld [vmem:[%s206 + $0x158] sm:$0xff]
      %v324 = vld [vmem:[%s206 + $0x160] sm:$0xff]
      %v325 = vld [vmem:[%s206 + $0x168] sm:$0xff]
      %v326 = vld [vmem:[%s206 + $0x170] sm:$0xff]
      %v327 = vld [vmem:[%s206 + $0x178] sm:$0xff]
      %v328 = vld [vmem:[%s206 + $0x180] sm:$0xff]
      %v329 = vld [vmem:[%s206 + $0x188] sm:$0xff]
      %v330 = vld [vmem:[%s206 + $0x190] sm:$0xff]
      %v331 = vld [vmem:[%s206 + $0x198] sm:$0xff]
      %v332 = vld [vmem:[%s206 + $0x1a0] sm:$0xff]
      %v333 = vld [vmem:[%s206 + $0x1a8] sm:$0xff]
      %v334 = vld [vmem:[%s206 + $0x1b0] sm:$0xff]
      %v335 = vld [vmem:[%s206 + $0x1b8] sm:$0xff]
      %v336 = vld [vmem:[%s206 + $0x1c0] sm:$0xff]
      %v337 = vld [vmem:[%s206 + $0x1c8] sm:$0xff]
      %v338 = vld [vmem:[%s206 + $0x1d0] sm:$0xff]
      %v339 = vld [vmem:[%s206 + $0x1d8] sm:$0xff]
      %v340 = vld [vmem:[%s206 + $0x1e0] sm:$0xff]
      %v341 = vld [vmem:[%s206 + $0x1e8] sm:$0xff]
      %v342 = vld [vmem:[%s206 + $0x1f0] sm:$0xff]
      %v343 = vld [vmem:[%s206 + $0x1f8] sm:$0xff]
      %v344 = vld [vmem:[%s206 + $0x200] sm:$0xff]
      %v345 = vld [vmem:[%s206 + $0x208] sm:$0xff]
      %v346 = vld [vmem:[%s206 + $0x210] sm:$0xff]
      %v347 = vld [vmem:[%s206 + $0x218] sm:$0xff]
      %v348 = vld [vmem:[%s206 + $0x220] sm:$0xff]
      %v349 = vld [vmem:[%s206 + $0x228] sm:$0xff]
      %v350 = vld [vmem:[%s206 + $0x230] sm:$0xff]
      %v351 = vld [vmem:[%s206 + $0x238] sm:$0xff]
      %v352 = vld [vmem:[%s206 + $0x240] sm:$0xff]
      %v353 = vld [vmem:[%s206 + $0x248] sm:$0xff]
      %v354 = vld [vmem:[%s206 + $0x250] sm:$0xff]
      %v355 = vld [vmem:[%s206 + $0x258] sm:$0xff]
      %v356 = vld [vmem:[%s206 + $0x260] sm:$0xff]
      %v357 = vld [vmem:[%s206 + $0x268] sm:$0xff]
      %v358 = vld [vmem:[%s206 + $0x270] sm:$0xff]
      %v359 = vld [vmem:[%s206 + $0x278] sm:$0xff]
      %v360 = vld [vmem:[%s206 + $0x280] sm:$0xff]
      %v361 = vld [vmem:[%s206 + $0x288] sm:$0xff]
      %v362 = vld [vmem:[%s206 + $0x290] sm:$0xff]
      %v363 = vld [vmem:[%s206 + $0x298] sm:$0xff]
      %v364 = vld [vmem:[%s206 + $0x2a0] sm:$0xff]
      %v365 = vld [vmem:[%s206 + $0x2a8] sm:$0xff]
      %v366 = vld [vmem:[%s206 + $0x2b0] sm:$0xff]
      %v367 = vld [vmem:[%s206 + $0x2b8] sm:$0xff]
      %v368 = vld [vmem:[%s206 + $0x2c0] sm:$0xff]
      %v369 = vld [vmem:[%s206 + $0x2c8] sm:$0xff]
      %v370 = vld [vmem:[%s206 + $0x2d0] sm:$0xff]
      %v371 = vld [vmem:[%s206 + $0x2d8] sm:$0xff]
      %v372 = vld [vmem:[%s206 + $0x2e0] sm:$0xff]
      %v373 = vld [vmem:[%s206 + $0x2e8] sm:$0xff]
      %v374 = vld [vmem:[%s206 + $0x2f0] sm:$0xff]
      %v375 = vld [vmem:[%s206 + $0x2f8] sm:$0xff]
      %v376 = vld [vmem:[%s206 + $0x300] sm:$0xff]
      %v377 = vld [vmem:[%s206 + $0x308] sm:$0xff]
      %v378 = vld [vmem:[%s206 + $0x310] sm:$0xff]
      %v379 = vld [vmem:[%s206 + $0x318] sm:$0xff]
      %v380 = vld [vmem:[%s206 + $0x320] sm:$0xff]
      %v381 = vld [vmem:[%s206 + $0x328] sm:$0xff]
      %v382 = vld [vmem:[%s206 + $0x330] sm:$0xff]
      %v383 = vld [vmem:[%s206 + $0x338] sm:$0xff]
      %v384 = vld [vmem:[%s206 + $0x340] sm:$0xff]
      %v385 = vld [vmem:[%s206 + $0x348] sm:$0xff]
      %v386 = vld [vmem:[%s206 + $0x350] sm:$0xff]
      %v387 = vld [vmem:[%s206 + $0x358] sm:$0xff]
      %v388 = vld [vmem:[%s206 + $0x360] sm:$0xff]
      %v389 = vld [vmem:[%s206 + $0x368] sm:$0xff]
      %v390 = vld [vmem:[%s206 + $0x370] sm:$0xff]
      %v391 = vld [vmem:[%s206 + $0x378] sm:$0xff]
      %v392 = vld [vmem:[%s206 + $0x380] sm:$0xff]
      %v393 = vld [vmem:[%s206 + $0x388] sm:$0xff]
      %v394 = vld [vmem:[%s206 + $0x390] sm:$0xff]
      %v395 = vld [vmem:[%s206 + $0x398] sm:$0xff]
      %v396 = vld [vmem:[%s206 + $0x3a0] sm:$0xff]
      %v397 = vld [vmem:[%s206 + $0x3a8] sm:$0xff]
      %v398 = vld [vmem:[%s206 + $0x3b0] sm:$0xff]
      %v399 = vld [vmem:[%s206 + $0x3b8] sm:$0xff]
      %v400 = vld [vmem:[%s206 + $0x3c0] sm:$0xff]
      %v401 = vld [vmem:[%s206 + $0x3c8] sm:$0xff]
      %v402 = vld [vmem:[%s206 + $0x3d0] sm:$0xff]
      %v403 = vld [vmem:[%s206 + $0x3d8] sm:$0xff]
      %v404 = vld [vmem:[%s206 + $0x3e0] sm:$0xff]
      %v405 = vld [vmem:[%s206 + $0x3e8] sm:$0xff]
      %v406 = vld [vmem:[%s206 + $0x3f0] sm:$0xff]
      %v407 = vld [vmem:[%s206 + $0x3f8] sm:$0xff]
      %409 = vset.pattern.permute.xlu0 0
      %410 = vperm.xlu0 %409, %v215
      %v411 = vpop.permute.xlu0 %410
      %414 = vset.pattern.permute.xlu0 0
      %415 = vperm.xlu0 %414, %v216
      %v416 = vpop.permute.xlu0 %415
      %419 = vset.pattern.permute.xlu0 0
      %420 = vperm.xlu0 %419, %v217
      %v421 = vpop.permute.xlu0 %420
      %424 = vset.pattern.permute.xlu0 0
      %425 = vperm.xlu0 %424, %v218
      %v426 = vpop.permute.xlu0 %425
      %429 = vset.pattern.permute.xlu0 0
      %430 = vperm.xlu0 %429, %v219
      %v431 = vpop.permute.xlu0 %430
      %434 = vset.pattern.permute.xlu0 0
      %435 = vperm.xlu0 %434, %v220
      %v436 = vpop.permute.xlu0 %435
      %439 = vset.pattern.permute.xlu0 0
      %440 = vperm.xlu0 %439, %v221
      %v441 = vpop.permute.xlu0 %440
      %444 = vset.pattern.permute.xlu0 0
      %445 = vperm.xlu0 %444, %v222
      %v446 = vpop.permute.xlu0 %445
      %449 = vset.pattern.permute.xlu0 0
      %450 = vperm.xlu0 %449, %v223
      %v451 = vpop.permute.xlu0 %450
      %454 = vset.pattern.permute.xlu0 0
      %455 = vperm.xlu0 %454, %v224
      %v456 = vpop.permute.xlu0 %455
      %459 = vset.pattern.permute.xlu0 0
      %460 = vperm.xlu0 %459, %v225
      %v461 = vpop.permute.xlu0 %460
      %464 = vset.pattern.permute.xlu0 0
      %465 = vperm.xlu0 %464, %v226
      %v466 = vpop.permute.xlu0 %465
      %469 = vset.pattern.permute.xlu0 0
      %470 = vperm.xlu0 %469, %v227
      %v471 = vpop.permute.xlu0 %470
      %474 = vset.pattern.permute.xlu0 0
      %475 = vperm.xlu0 %474, %v228
      %v476 = vpop.permute.xlu0 %475
      %479 = vset.pattern.permute.xlu0 0
      %480 = vperm.xlu0 %479, %v229
      %v481 = vpop.permute.xlu0 %480
      %484 = vset.pattern.permute.xlu0 0
      %485 = vperm.xlu0 %484, %v230
      %v486 = vpop.permute.xlu0 %485
      %489 = vset.pattern.permute.xlu0 0
      %490 = vperm.xlu0 %489, %v231
      %v491 = vpop.permute.xlu0 %490
      %494 = vset.pattern.permute.xlu0 0
      %495 = vperm.xlu0 %494, %v232
      %v496 = vpop.permute.xlu0 %495
      %499 = vset.pattern.permute.xlu0 0
      %500 = vperm.xlu0 %499, %v233
      %v501 = vpop.permute.xlu0 %500
      %504 = vset.pattern.permute.xlu0 0
      %505 = vperm.xlu0 %504, %v234
      %v506 = vpop.permute.xlu0 %505
      %509 = vset.pattern.permute.xlu0 0
      %510 = vperm.xlu0 %509, %v235
      %v511 = vpop.permute.xlu0 %510
      %514 = vset.pattern.permute.xlu0 0
      %515 = vperm.xlu0 %514, %v236
      %v516 = vpop.permute.xlu0 %515
      %519 = vset.pattern.permute.xlu0 0
      %520 = vperm.xlu0 %519, %v237
      %v521 = vpop.permute.xlu0 %520
      %524 = vset.pattern.permute.xlu0 0
      %525 = vperm.xlu0 %524, %v238
      %v526 = vpop.permute.xlu0 %525
      %529 = vset.pattern.permute.xlu0 0
      %530 = vperm.xlu0 %529, %v239
      %v531 = vpop.permute.xlu0 %530
      %534 = vset.pattern.permute.xlu0 0
      %535 = vperm.xlu0 %534, %v240
      %v536 = vpop.permute.xlu0 %535
      %539 = vset.pattern.permute.xlu0 0
      %540 = vperm.xlu0 %539, %v241
      %v541 = vpop.permute.xlu0 %540
      %544 = vset.pattern.permute.xlu0 0
      %545 = vperm.xlu0 %544, %v242
      %v546 = vpop.permute.xlu0 %545
      %549 = vset.pattern.permute.xlu0 0
      %550 = vperm.xlu0 %549, %v243
      %v551 = vpop.permute.xlu0 %550
      %554 = vset.pattern.permute.xlu0 0
      %555 = vperm.xlu0 %554, %v244
      %v556 = vpop.permute.xlu0 %555
      %559 = vset.pattern.permute.xlu0 0
      %560 = vperm.xlu0 %559, %v245
      %v561 = vpop.permute.xlu0 %560
      %564 = vset.pattern.permute.xlu0 0
      %565 = vperm.xlu0 %564, %v246
      %v566 = vpop.permute.xlu0 %565
      %569 = vset.pattern.permute.xlu0 0
      %570 = vperm.xlu0 %569, %v247
      %v571 = vpop.permute.xlu0 %570
      %574 = vset.pattern.permute.xlu0 0
      %575 = vperm.xlu0 %574, %v248
      %v576 = vpop.permute.xlu0 %575
      %579 = vset.pattern.permute.xlu0 0
      %580 = vperm.xlu0 %579, %v249
      %v581 = vpop.permute.xlu0 %580
      %584 = vset.pattern.permute.xlu0 0
      %585 = vperm.xlu0 %584, %v250
      %v586 = vpop.permute.xlu0 %585
      %589 = vset.pattern.permute.xlu0 0
      %590 = vperm.xlu0 %589, %v251
      %v591 = vpop.permute.xlu0 %590
      %594 = vset.pattern.permute.xlu0 0
      %595 = vperm.xlu0 %594, %v252
      %v596 = vpop.permute.xlu0 %595
      %599 = vset.pattern.permute.xlu0 0
      %600 = vperm.xlu0 %599, %v253
      %v601 = vpop.permute.xlu0 %600
      %604 = vset.pattern.permute.xlu0 0
      %605 = vperm.xlu0 %604, %v254
      %v606 = vpop.permute.xlu0 %605
      %609 = vset.pattern.permute.xlu0 0
      %610 = vperm.xlu0 %609, %v255
      %v611 = vpop.permute.xlu0 %610
      %614 = vset.pattern.permute.xlu0 0
      %615 = vperm.xlu0 %614, %v256
      %v616 = vpop.permute.xlu0 %615
      %619 = vset.pattern.permute.xlu0 0
      %620 = vperm.xlu0 %619, %v257
      %v621 = vpop.permute.xlu0 %620
      %624 = vset.pattern.permute.xlu0 0
      %625 = vperm.xlu0 %624, %v258
      %v626 = vpop.permute.xlu0 %625
      %629 = vset.pattern.permute.xlu0 0
      %630 = vperm.xlu0 %629, %v259
      %v631 = vpop.permute.xlu0 %630
      %634 = vset.pattern.permute.xlu0 0
      %635 = vperm.xlu0 %634, %v260
      %v636 = vpop.permute.xlu0 %635
      %639 = vset.pattern.permute.xlu0 0
      %640 = vperm.xlu0 %639, %v261
      %v641 = vpop.permute.xlu0 %640
      %644 = vset.pattern.permute.xlu0 0
      %645 = vperm.xlu0 %644, %v262
      %v646 = vpop.permute.xlu0 %645
      %649 = vset.pattern.permute.xlu0 0
      %650 = vperm.xlu0 %649, %v263
      %v651 = vpop.permute.xlu0 %650
      %654 = vset.pattern.permute.xlu0 0
      %655 = vperm.xlu0 %654, %v264
      %v656 = vpop.permute.xlu0 %655
      %659 = vset.pattern.permute.xlu0 0
      %660 = vperm.xlu0 %659, %v265
      %v661 = vpop.permute.xlu0 %660
      %664 = vset.pattern.permute.xlu0 0
      %665 = vperm.xlu0 %664, %v266
      %v666 = vpop.permute.xlu0 %665
      %669 = vset.pattern.permute.xlu0 0
      %670 = vperm.xlu0 %669, %v267
      %v671 = vpop.permute.xlu0 %670
      %674 = vset.pattern.permute.xlu0 0
      %675 = vperm.xlu0 %674, %v268
      %v676 = vpop.permute.xlu0 %675
      %679 = vset.pattern.permute.xlu0 0
      %680 = vperm.xlu0 %679, %v269
      %v681 = vpop.permute.xlu0 %680
      %684 = vset.pattern.permute.xlu0 0
      %685 = vperm.xlu0 %684, %v270
      %v686 = vpop.permute.xlu0 %685
      %689 = vset.pattern.permute.xlu0 0
      %690 = vperm.xlu0 %689, %v271
      %v691 = vpop.permute.xlu0 %690
      %694 = vset.pattern.permute.xlu0 0
      %695 = vperm.xlu0 %694, %v272
      %v696 = vpop.permute.xlu0 %695
      %699 = vset.pattern.permute.xlu0 0
      %700 = vperm.xlu0 %699, %v273
      %v701 = vpop.permute.xlu0 %700
      %704 = vset.pattern.permute.xlu0 0
      %705 = vperm.xlu0 %704, %v274
      %v706 = vpop.permute.xlu0 %705
      %709 = vset.pattern.permute.xlu0 0
      %710 = vperm.xlu0 %709, %v275
      %v711 = vpop.permute.xlu0 %710
      %714 = vset.pattern.permute.xlu0 0
      %715 = vperm.xlu0 %714, %v276
      %v716 = vpop.permute.xlu0 %715
      %719 = vset.pattern.permute.xlu0 0
      %720 = vperm.xlu0 %719, %v277
      %v721 = vpop.permute.xlu0 %720
      %724 = vset.pattern.permute.xlu0 0
      %725 = vperm.xlu0 %724, %v278
      %v726 = vpop.permute.xlu0 %725
      %v728 = vmul.f32 %v280, %v411
      %v729 = vmul.f32 %v281, %v411
      %v730 = vmul.f32 %v282, %v416
      %v731 = vmul.f32 %v283, %v416
      %v732 = vmul.f32 %v284, %v421
      %v733 = vmul.f32 %v285, %v421
      %v734 = vmul.f32 %v286, %v426
      %v735 = vmul.f32 %v287, %v426
      %v736 = vmul.f32 %v288, %v431
      %v737 = vmul.f32 %v289, %v431
      %v738 = vmul.f32 %v290, %v436
      %v739 = vmul.f32 %v291, %v436
      %v740 = vmul.f32 %v292, %v441
      %v741 = vmul.f32 %v293, %v441
      %v742 = vmul.f32 %v294, %v446
      %v743 = vmul.f32 %v295, %v446
      %v744 = vmul.f32 %v296, %v451
      %v745 = vmul.f32 %v297, %v451
      %v746 = vmul.f32 %v298, %v456
      %v747 = vmul.f32 %v299, %v456
      %v748 = vmul.f32 %v300, %v461
      %v749 = vmul.f32 %v301, %v461
      %v750 = vmul.f32 %v302, %v466
      %v751 = vmul.f32 %v303, %v466
      %v752 = vmul.f32 %v304, %v471
      %v753 = vmul.f32 %v305, %v471
      %v754 = vmul.f32 %v306, %v476
      %v755 = vmul.f32 %v307, %v476
      %v756 = vmul.f32 %v308, %v481
      %v757 = vmul.f32 %v309, %v481
      %v758 = vmul.f32 %v310, %v486
      %v759 = vmul.f32 %v311, %v486
      %v760 = vmul.f32 %v312, %v491
      %v761 = vmul.f32 %v313, %v491
      %v762 = vmul.f32 %v314, %v496
      %v763 = vmul.f32 %v315, %v496
      %v764 = vmul.f32 %v316, %v501
      %v765 = vmul.f32 %v317, %v501
      %v766 = vmul.f32 %v318, %v506
      %v767 = vmul.f32 %v319, %v506
      %v768 = vmul.f32 %v320, %v511
      %v769 = vmul.f32 %v321, %v511
      %v770 = vmul.f32 %v322, %v516
      %v771 = vmul.f32 %v323, %v516
      %v772 = vmul.f32 %v324, %v521
      %v773 = vmul.f32 %v325, %v521
      %v774 = vmul.f32 %v326, %v526
      %v775 = vmul.f32 %v327, %v526
      %v776 = vmul.f32 %v328, %v531
      %v777 = vmul.f32 %v329, %v531
      %v778 = vmul.f32 %v330, %v536
      %v779 = vmul.f32 %v331, %v536
      %v780 = vmul.f32 %v332, %v541
      %v781 = vmul.f32 %v333, %v541
      %v782 = vmul.f32 %v334, %v546
      %v783 = vmul.f32 %v335, %v546
      %v784 = vmul.f32 %v336, %v551
      %v785 = vmul.f32 %v337, %v551
      %v786 = vmul.f32 %v338, %v556
      %v787 = vmul.f32 %v339, %v556
      %v788 = vmul.f32 %v340, %v561
      %v789 = vmul.f32 %v341, %v561
      %v790 = vmul.f32 %v342, %v566
      %v791 = vmul.f32 %v343, %v566
      %v792 = vmul.f32 %v344, %v571
      %v793 = vmul.f32 %v345, %v571
      %v794 = vmul.f32 %v346, %v576
      %v795 = vmul.f32 %v347, %v576
      %v796 = vmul.f32 %v348, %v581
      %v797 = vmul.f32 %v349, %v581
      %v798 = vmul.f32 %v350, %v586
      %v799 = vmul.f32 %v351, %v586
      %v800 = vmul.f32 %v352, %v591
      %v801 = vmul.f32 %v353, %v591
      %v802 = vmul.f32 %v354, %v596
      %v803 = vmul.f32 %v355, %v596
      %v804 = vmul.f32 %v356, %v601
      %v805 = vmul.f32 %v357, %v601
      %v806 = vmul.f32 %v358, %v606
      %v807 = vmul.f32 %v359, %v606
      %v808 = vmul.f32 %v360, %v611
      %v809 = vmul.f32 %v361, %v611
      %v810 = vmul.f32 %v362, %v616
      %v811 = vmul.f32 %v363, %v616
      %v812 = vmul.f32 %v364, %v621
      %v813 = vmul.f32 %v365, %v621
      %v814 = vmul.f32 %v366, %v626
      %v815 = vmul.f32 %v367, %v626
      %v816 = vmul.f32 %v368, %v631
      %v817 = vmul.f32 %v369, %v631
      %v818 = vmul.f32 %v370, %v636
      %v819 = vmul.f32 %v371, %v636
      %v820 = vmul.f32 %v372, %v641
      %v821 = vmul.f32 %v373, %v641
      %v822 = vmul.f32 %v374, %v646
      %v823 = vmul.f32 %v375, %v646
      %v824 = vmul.f32 %v376, %v651
      %v825 = vmul.f32 %v377, %v651
      %v826 = vmul.f32 %v378, %v656
      %v827 = vmul.f32 %v379, %v656
      %v828 = vmul.f32 %v380, %v661
      %v829 = vmul.f32 %v381, %v661
      %v830 = vmul.f32 %v382, %v666
      %v831 = vmul.f32 %v383, %v666
      %v832 = vmul.f32 %v384, %v671
      %v833 = vmul.f32 %v385, %v671
      %v834 = vmul.f32 %v386, %v676
      %v835 = vmul.f32 %v387, %v676
      %v836 = vmul.f32 %v388, %v681
      %v837 = vmul.f32 %v389, %v681
      %v838 = vmul.f32 %v390, %v686
      %v839 = vmul.f32 %v391, %v686
      %v840 = vmul.f32 %v392, %v691
      %v841 = vmul.f32 %v393, %v691
      %v842 = vmul.f32 %v394, %v696
      %v843 = vmul.f32 %v395, %v696
      %v844 = vmul.f32 %v396, %v701
      %v845 = vmul.f32 %v397, %v701
      %v846 = vmul.f32 %v398, %v706
      %v847 = vmul.f32 %v399, %v706
      %v848 = vmul.f32 %v400, %v711
      %v849 = vmul.f32 %v401, %v711
      %v850 = vmul.f32 %v402, %v716
      %v851 = vmul.f32 %v403, %v716
      %v852 = vmul.f32 %v404, %v721
      %v853 = vmul.f32 %v405, %v721
      %v854 = vmul.f32 %v406, %v726
      %v855 = vmul.f32 %v407, %v726
      %v856 = vadd.f32 %v728, %v730
      %v857 = vadd.f32 %v856, %v732
      %v858 = vadd.f32 %v857, %v734
      %v859 = vadd.f32 %v858, %v736
      %v860 = vadd.f32 %v859, %v738
      %v861 = vadd.f32 %v860, %v740
      %v862 = vadd.f32 %v861, %v742
      %v863 = vadd.f32 %v862, %v744
      %v864 = vadd.f32 %v863, %v746
      %v865 = vadd.f32 %v864, %v748
      %v866 = vadd.f32 %v865, %v750
      %v867 = vadd.f32 %v866, %v752
      %v868 = vadd.f32 %v867, %v754
      %v869 = vadd.f32 %v868, %v756
      %v870 = vadd.f32 %v869, %v758
      %v871 = vadd.f32 %v870, %v760
      %v872 = vadd.f32 %v871, %v762
      %v873 = vadd.f32 %v872, %v764
      %v874 = vadd.f32 %v873, %v766
      %v875 = vadd.f32 %v874, %v768
      %v876 = vadd.f32 %v875, %v770
      %v877 = vadd.f32 %v876, %v772
      %v878 = vadd.f32 %v877, %v774
      %v879 = vadd.f32 %v878, %v776
      %v880 = vadd.f32 %v879, %v778
      %v881 = vadd.f32 %v880, %v780
      %v882 = vadd.f32 %v881, %v782
      %v883 = vadd.f32 %v882, %v784
      %v884 = vadd.f32 %v883, %v786
      %v885 = vadd.f32 %v884, %v788
      %v886 = vadd.f32 %v885, %v790
      %v887 = vadd.f32 %v886, %v792
      %v888 = vadd.f32 %v887, %v794
      %v889 = vadd.f32 %v888, %v796
      %v890 = vadd.f32 %v889, %v798
      %v891 = vadd.f32 %v890, %v800
      %v892 = vadd.f32 %v891, %v802
      %v893 = vadd.f32 %v892, %v804
      %v894 = vadd.f32 %v893, %v806
      %v895 = vadd.f32 %v894, %v808
      %v896 = vadd.f32 %v895, %v810
      %v897 = vadd.f32 %v896, %v812
      %v898 = vadd.f32 %v897, %v814
      %v899 = vadd.f32 %v898, %v816
      %v900 = vadd.f32 %v899, %v818
      %v901 = vadd.f32 %v900, %v820
      %v902 = vadd.f32 %v901, %v822
      %v903 = vadd.f32 %v902, %v824
      %v904 = vadd.f32 %v903, %v826
      %v905 = vadd.f32 %v904, %v828
      %v906 = vadd.f32 %v905, %v830
      %v907 = vadd.f32 %v906, %v832
      %v908 = vadd.f32 %v907, %v834
      %v909 = vadd.f32 %v908, %v836
      %v910 = vadd.f32 %v909, %v838
      %v911 = vadd.f32 %v910, %v840
      %v912 = vadd.f32 %v911, %v842
      %v913 = vadd.f32 %v912, %v844
      %v914 = vadd.f32 %v913, %v846
      %v915 = vadd.f32 %v914, %v848
      %v916 = vadd.f32 %v915, %v850
      %v917 = vadd.f32 %v916, %v852
      %v918 = vadd.f32 %v917, %v854
      %v919 = vrot.slane %v918, 4
      %v920 = vadd.f32 %v918, %v919
      %v921 = vrot.slane %v920, 2
      %v922 = vadd.f32 %v920, %v921
      %v923 = vrot.slane %v922, 1
      %v924 = vadd.f32 %v922, %v923
      %v925 = vadd.f32 %v729, %v731
      %v926 = vadd.f32 %v925, %v733
      %v927 = vadd.f32 %v926, %v735
      %v928 = vadd.f32 %v927, %v737
      %v929 = vadd.f32 %v928, %v739
      %v930 = vadd.f32 %v929, %v741
      %v931 = vadd.f32 %v930, %v743
      %v932 = vadd.f32 %v931, %v745
      %v933 = vadd.f32 %v932, %v747
      %v934 = vadd.f32 %v933, %v749
      %v935 = vadd.f32 %v934, %v751
      %v936 = vadd.f32 %v935, %v753
      %v937 = vadd.f32 %v936, %v755
      %v938 = vadd.f32 %v937, %v757
      %v939 = vadd.f32 %v938, %v759
      %v940 = vadd.f32 %v939, %v761
      %v941 = vadd.f32 %v940, %v763
      %v942 = vadd.f32 %v941, %v765
      %v943 = vadd.f32 %v942, %v767
      %v944 = vadd.f32 %v943, %v769
      %v945 = vadd.f32 %v944, %v771
      %v946 = vadd.f32 %v945, %v773
      %v947 = vadd.f32 %v946, %v775
      %v948 = vadd.f32 %v947, %v777
      %v949 = vadd.f32 %v948, %v779
      %v950 = vadd.f32 %v949, %v781
      %v951 = vadd.f32 %v950, %v783
      %v952 = vadd.f32 %v951, %v785
      %v953 = vadd.f32 %v952, %v787
      %v954 = vadd.f32 %v953, %v789
      %v955 = vadd.f32 %v954, %v791
      %v956 = vadd.f32 %v955, %v793
      %v957 = vadd.f32 %v956, %v795
      %v958 = vadd.f32 %v957, %v797
      %v959 = vadd.f32 %v958, %v799
      %v960 = vadd.f32 %v959, %v801
      %v961 = vadd.f32 %v960, %v803
      %v962 = vadd.f32 %v961, %v805
      %v963 = vadd.f32 %v962, %v807
      %v964 = vadd.f32 %v963, %v809
      %v965 = vadd.f32 %v964, %v811
      %v966 = vadd.f32 %v965, %v813
      %v967 = vadd.f32 %v966, %v815
      %v968 = vadd.f32 %v967, %v817
      %v969 = vadd.f32 %v968, %v819
      %v970 = vadd.f32 %v969, %v821
      %v971 = vadd.f32 %v970, %v823
      %v972 = vadd.f32 %v971, %v825
      %v973 = vadd.f32 %v972, %v827
      %v974 = vadd.f32 %v973, %v829
      %v975 = vadd.f32 %v974, %v831
      %v976 = vadd.f32 %v975, %v833
      %v977 = vadd.f32 %v976, %v835
      %v978 = vadd.f32 %v977, %v837
      %v979 = vadd.f32 %v978, %v839
      %v980 = vadd.f32 %v979, %v841
      %v981 = vadd.f32 %v980, %v843
      %v982 = vadd.f32 %v981, %v845
      %v983 = vadd.f32 %v982, %v847
      %v984 = vadd.f32 %v983, %v849
      %v985 = vadd.f32 %v984, %v851
      %v986 = vadd.f32 %v985, %v853
      %v987 = vadd.f32 %v986, %v855
      %v988 = vrot.slane %v987, 4
      %v989 = vadd.f32 %v987, %v988
      %v990 = vrot.slane %v989, 2
      %v991 = vadd.f32 %v989, %v990
      %v992 = vrot.slane %v991, 1
      %v993 = vadd.f32 %v991, %v992
      %v994 = vstv %s279
      %v995 = vadd.f32 %v924, %v994
      %v996 = vadd.f32 %v993, %v994
      %v997 = vand.u32 2147483647, %v995
      %v998 = vand.u32 2147483647, %v996
      %v999 = vld [vmem:[%s211] sm:$0xff]
      %v1000 = vld [vmem:[%s211 + $0x8] sm:$0xff]
      %v1001 = vld [vmem:[%s211 + $0x10] sm:$0xff]
      %v1002 = vld [vmem:[%s211 + $0x18] sm:$0xff]
      %v1003 = vld [vmem:[%s211 + $0x20] sm:$0xff]
      %v1004 = vld [vmem:[%s211 + $0x28] sm:$0xff]
      %v1005 = vld [vmem:[%s211 + $0x30] sm:$0xff]
      %v1006 = vld [vmem:[%s211 + $0x38] sm:$0xff]
      %v1007 = vld [vmem:[%s211 + $0x40] sm:$0xff]
      %v1008 = vld [vmem:[%s211 + $0x48] sm:$0xff]
      %v1009 = vld [vmem:[%s211 + $0x50] sm:$0xff]
      %v1010 = vld [vmem:[%s211 + $0x58] sm:$0xff]
      %v1011 = vld [vmem:[%s211 + $0x60] sm:$0xff]
      %v1012 = vld [vmem:[%s211 + $0x68] sm:$0xff]
      %v1013 = vld [vmem:[%s211 + $0x70] sm:$0xff]
      %v1014 = vld [vmem:[%s211 + $0x78] sm:$0xff]
      %v1015 = vld [vmem:[%s211 + $0x80] sm:$0xff]
      %v1016 = vld [vmem:[%s211 + $0x88] sm:$0xff]
      %v1017 = vld [vmem:[%s211 + $0x90] sm:$0xff]
      %v1018 = vld [vmem:[%s211 + $0x98] sm:$0xff]
      %v1019 = vld [vmem:[%s211 + $0xa0] sm:$0xff]
      %v1020 = vld [vmem:[%s211 + $0xa8] sm:$0xff]
      %v1021 = vld [vmem:[%s211 + $0xb0] sm:$0xff]
      %v1022 = vld [vmem:[%s211 + $0xb8] sm:$0xff]
      %v1023 = vld [vmem:[%s211 + $0xc0] sm:$0xff]
      %v1024 = vld [vmem:[%s211 + $0xc8] sm:$0xff]
      %v1025 = vld [vmem:[%s211 + $0xd0] sm:$0xff]
      %v1026 = vld [vmem:[%s211 + $0xd8] sm:$0xff]
      %v1027 = vld [vmem:[%s211 + $0xe0] sm:$0xff]
      %v1028 = vld [vmem:[%s211 + $0xe8] sm:$0xff]
      %v1029 = vld [vmem:[%s211 + $0xf0] sm:$0xff]
      %v1030 = vld [vmem:[%s211 + $0xf8] sm:$0xff]
      %v1031 = vld [vmem:[%s211 + $0x100] sm:$0xff]
      %v1032 = vld [vmem:[%s211 + $0x108] sm:$0xff]
      %v1033 = vld [vmem:[%s211 + $0x110] sm:$0xff]
      %v1034 = vld [vmem:[%s211 + $0x118] sm:$0xff]
      %v1035 = vld [vmem:[%s211 + $0x120] sm:$0xff]
      %v1036 = vld [vmem:[%s211 + $0x128] sm:$0xff]
      %v1037 = vld [vmem:[%s211 + $0x130] sm:$0xff]
      %v1038 = vld [vmem:[%s211 + $0x138] sm:$0xff]
      %v1039 = vld [vmem:[%s211 + $0x140] sm:$0xff]
      %v1040 = vld [vmem:[%s211 + $0x148] sm:$0xff]
      %v1041 = vld [vmem:[%s211 + $0x150] sm:$0xff]
      %v1042 = vld [vmem:[%s211 + $0x158] sm:$0xff]
      %v1043 = vld [vmem:[%s211 + $0x160] sm:$0xff]
      %v1044 = vld [vmem:[%s211 + $0x168] sm:$0xff]
      %v1045 = vld [vmem:[%s211 + $0x170] sm:$0xff]
      %v1046 = vld [vmem:[%s211 + $0x178] sm:$0xff]
      %v1047 = vld [vmem:[%s211 + $0x180] sm:$0xff]
      %v1048 = vld [vmem:[%s211 + $0x188] sm:$0xff]
      %v1049 = vld [vmem:[%s211 + $0x190] sm:$0xff]
      %v1050 = vld [vmem:[%s211 + $0x198] sm:$0xff]
      %v1051 = vld [vmem:[%s211 + $0x1a0] sm:$0xff]
      %v1052 = vld [vmem:[%s211 + $0x1a8] sm:$0xff]
      %v1053 = vld [vmem:[%s211 + $0x1b0] sm:$0xff]
      %v1054 = vld [vmem:[%s211 + $0x1b8] sm:$0xff]
      %v1055 = vld [vmem:[%s211 + $0x1c0] sm:$0xff]
      %v1056 = vld [vmem:[%s211 + $0x1c8] sm:$0xff]
      %v1057 = vld [vmem:[%s211 + $0x1d0] sm:$0xff]
      %v1058 = vld [vmem:[%s211 + $0x1d8] sm:$0xff]
      %v1059 = vld [vmem:[%s211 + $0x1e0] sm:$0xff]
      %v1060 = vld [vmem:[%s211 + $0x1e8] sm:$0xff]
      %v1061 = vld [vmem:[%s211 + $0x1f0] sm:$0xff]
      %v1062 = vld [vmem:[%s211 + $0x1f8] sm:$0xff]
      %v1063 = vmul.f32 %v999, %v411
      %v1064 = vmul.f32 %v1000, %v416
      %v1065 = vmul.f32 %v1001, %v421
      %v1066 = vmul.f32 %v1002, %v426
      %v1067 = vmul.f32 %v1003, %v431
      %v1068 = vmul.f32 %v1004, %v436
      %v1069 = vmul.f32 %v1005, %v441
      %v1070 = vmul.f32 %v1006, %v446
      %v1071 = vmul.f32 %v1007, %v451
      %v1072 = vmul.f32 %v1008, %v456
      %v1073 = vmul.f32 %v1009, %v461
      %v1074 = vmul.f32 %v1010, %v466
      %v1075 = vmul.f32 %v1011, %v471
      %v1076 = vmul.f32 %v1012, %v476
      %v1077 = vmul.f32 %v1013, %v481
      %v1078 = vmul.f32 %v1014, %v486
      %v1079 = vmul.f32 %v1015, %v491
      %v1080 = vmul.f32 %v1016, %v496
      %v1081 = vmul.f32 %v1017, %v501
      %v1082 = vmul.f32 %v1018, %v506
      %v1083 = vmul.f32 %v1019, %v511
      %v1084 = vmul.f32 %v1020, %v516
      %v1085 = vmul.f32 %v1021, %v521
      %v1086 = vmul.f32 %v1022, %v526
      %v1087 = vmul.f32 %v1023, %v531
      %v1088 = vmul.f32 %v1024, %v536
      %v1089 = vmul.f32 %v1025, %v541
      %v1090 = vmul.f32 %v1026, %v546
      %v1091 = vmul.f32 %v1027, %v551
      %v1092 = vmul.f32 %v1028, %v556
      %v1093 = vmul.f32 %v1029, %v561
      %v1094 = vmul.f32 %v1030, %v566
      %v1095 = vmul.f32 %v1031, %v571
      %v1096 = vmul.f32 %v1032, %v576
      %v1097 = vmul.f32 %v1033, %v581
      %v1098 = vmul.f32 %v1034, %v586
      %v1099 = vmul.f32 %v1035, %v591
      %v1100 = vmul.f32 %v1036, %v596
      %v1101 = vmul.f32 %v1037, %v601
      %v1102 = vmul.f32 %v1038, %v606
      %v1103 = vmul.f32 %v1039, %v611
      %v1104 = vmul.f32 %v1040, %v616
      %v1105 = vmul.f32 %v1041, %v621
      %v1106 = vmul.f32 %v1042, %v626
      %v1107 = vmul.f32 %v1043, %v631
      %v1108 = vmul.f32 %v1044, %v636
      %v1109 = vmul.f32 %v1045, %v641
      %v1110 = vmul.f32 %v1046, %v646
      %v1111 = vmul.f32 %v1047, %v651
      %v1112 = vmul.f32 %v1048, %v656
      %v1113 = vmul.f32 %v1049, %v661
      %v1114 = vmul.f32 %v1050, %v666
      %v1115 = vmul.f32 %v1051, %v671
      %v1116 = vmul.f32 %v1052, %v676
      %v1117 = vmul.f32 %v1053, %v681
      %v1118 = vmul.f32 %v1054, %v686
      %v1119 = vmul.f32 %v1055, %v691
      %v1120 = vmul.f32 %v1056, %v696
      %v1121 = vmul.f32 %v1057, %v701
      %v1122 = vmul.f32 %v1058, %v706
      %v1123 = vmul.f32 %v1059, %v711
      %v1124 = vmul.f32 %v1060, %v716
      %v1125 = vmul.f32 %v1061, %v721
      %v1126 = vmul.f32 %v1062, %v726
      %vm1127 = vcmask 523264
      %v1128 = vsel %vm1127, %v1063, 0.0
      %v1129 = vsel %vm1127, %v1064, 0.0
      %v1130 = vadd.f32 %v1128, %v1129
      %v1131 = vsel %vm1127, %v1065, 0.0
      %v1132 = vadd.f32 %v1130, %v1131
      %v1133 = vsel %vm1127, %v1066, 0.0
      %v1134 = vadd.f32 %v1132, %v1133
      %v1135 = vsel %vm1127, %v1067, 0.0
      %v1136 = vadd.f32 %v1134, %v1135
      %v1137 = vsel %vm1127, %v1068, 0.0
      %v1138 = vadd.f32 %v1136, %v1137
      %v1139 = vsel %vm1127, %v1069, 0.0
      %v1140 = vadd.f32 %v1138, %v1139
      %v1141 = vsel %vm1127, %v1070, 0.0
      %v1142 = vadd.f32 %v1140, %v1141
      %v1143 = vsel %vm1127, %v1071, 0.0
      %v1144 = vadd.f32 %v1142, %v1143
      %v1145 = vsel %vm1127, %v1072, 0.0
      %v1146 = vadd.f32 %v1144, %v1145
      %v1147 = vsel %vm1127, %v1073, 0.0
      %v1148 = vadd.f32 %v1146, %v1147
      %v1149 = vsel %vm1127, %v1074, 0.0
      %v1150 = vadd.f32 %v1148, %v1149
      %v1151 = vsel %vm1127, %v1075, 0.0
      %v1152 = vadd.f32 %v1150, %v1151
      %v1153 = vsel %vm1127, %v1076, 0.0
      %v1154 = vadd.f32 %v1152, %v1153
      %v1155 = vsel %vm1127, %v1077, 0.0
      %v1156 = vadd.f32 %v1154, %v1155
      %v1157 = vsel %vm1127, %v1078, 0.0
      %v1158 = vadd.f32 %v1156, %v1157
      %v1159 = vsel %vm1127, %v1079, 0.0
      %v1160 = vadd.f32 %v1158, %v1159
      %v1161 = vsel %vm1127, %v1080, 0.0
      %v1162 = vadd.f32 %v1160, %v1161
      %v1163 = vsel %vm1127, %v1081, 0.0
      %v1164 = vadd.f32 %v1162, %v1163
      %v1165 = vsel %vm1127, %v1082, 0.0
      %v1166 = vadd.f32 %v1164, %v1165
      %v1167 = vsel %vm1127, %v1083, 0.0
      %v1168 = vadd.f32 %v1166, %v1167
      %v1169 = vsel %vm1127, %v1084, 0.0
      %v1170 = vadd.f32 %v1168, %v1169
      %v1171 = vsel %vm1127, %v1085, 0.0
      %v1172 = vadd.f32 %v1170, %v1171
      %v1173 = vsel %vm1127, %v1086, 0.0
      %v1174 = vadd.f32 %v1172, %v1173
      %v1175 = vsel %vm1127, %v1087, 0.0
      %v1176 = vadd.f32 %v1174, %v1175
      %v1177 = vsel %vm1127, %v1088, 0.0
      %v1178 = vadd.f32 %v1176, %v1177
      %v1179 = vsel %vm1127, %v1089, 0.0
      %v1180 = vadd.f32 %v1178, %v1179
      %v1181 = vsel %vm1127, %v1090, 0.0
      %v1182 = vadd.f32 %v1180, %v1181
      %v1183 = vsel %vm1127, %v1091, 0.0
      %v1184 = vadd.f32 %v1182, %v1183
      %v1185 = vsel %vm1127, %v1092, 0.0
      %v1186 = vadd.f32 %v1184, %v1185
      %v1187 = vsel %vm1127, %v1093, 0.0
      %v1188 = vadd.f32 %v1186, %v1187
      %v1189 = vsel %vm1127, %v1094, 0.0
      %v1190 = vadd.f32 %v1188, %v1189
      %v1191 = vsel %vm1127, %v1095, 0.0
      %v1192 = vadd.f32 %v1190, %v1191
      %v1193 = vsel %vm1127, %v1096, 0.0
      %v1194 = vadd.f32 %v1192, %v1193
      %v1195 = vsel %vm1127, %v1097, 0.0
      %v1196 = vadd.f32 %v1194, %v1195
      %v1197 = vsel %vm1127, %v1098, 0.0
      %v1198 = vadd.f32 %v1196, %v1197
      %v1199 = vsel %vm1127, %v1099, 0.0
      %v1200 = vadd.f32 %v1198, %v1199
      %v1201 = vsel %vm1127, %v1100, 0.0
      %v1202 = vadd.f32 %v1200, %v1201
      %v1203 = vsel %vm1127, %v1101, 0.0
      %v1204 = vadd.f32 %v1202, %v1203
      %v1205 = vsel %vm1127, %v1102, 0.0
      %v1206 = vadd.f32 %v1204, %v1205
      %v1207 = vsel %vm1127, %v1103, 0.0
      %v1208 = vadd.f32 %v1206, %v1207
      %v1209 = vsel %vm1127, %v1104, 0.0
      %v1210 = vadd.f32 %v1208, %v1209
      %v1211 = vsel %vm1127, %v1105, 0.0
      %v1212 = vadd.f32 %v1210, %v1211
      %v1213 = vsel %vm1127, %v1106, 0.0
      %v1214 = vadd.f32 %v1212, %v1213
      %v1215 = vsel %vm1127, %v1107, 0.0
      %v1216 = vadd.f32 %v1214, %v1215
      %v1217 = vsel %vm1127, %v1108, 0.0
      %v1218 = vadd.f32 %v1216, %v1217
      %v1219 = vsel %vm1127, %v1109, 0.0
      %v1220 = vadd.f32 %v1218, %v1219
      %v1221 = vsel %vm1127, %v1110, 0.0
      %v1222 = vadd.f32 %v1220, %v1221
      %v1223 = vsel %vm1127, %v1111, 0.0
      %v1224 = vadd.f32 %v1222, %v1223
      %v1225 = vsel %vm1127, %v1112, 0.0
      %v1226 = vadd.f32 %v1224, %v1225
      %v1227 = vsel %vm1127, %v1113, 0.0
      %v1228 = vadd.f32 %v1226, %v1227
      %v1229 = vsel %vm1127, %v1114, 0.0
      %v1230 = vadd.f32 %v1228, %v1229
      %v1231 = vsel %vm1127, %v1115, 0.0
      %v1232 = vadd.f32 %v1230, %v1231
      %v1233 = vsel %vm1127, %v1116, 0.0
      %v1234 = vadd.f32 %v1232, %v1233
      %v1235 = vsel %vm1127, %v1117, 0.0
      %v1236 = vadd.f32 %v1234, %v1235
      %v1237 = vsel %vm1127, %v1118, 0.0
      %v1238 = vadd.f32 %v1236, %v1237
      %v1239 = vsel %vm1127, %v1119, 0.0
      %v1240 = vadd.f32 %v1238, %v1239
      %v1241 = vsel %vm1127, %v1120, 0.0
      %v1242 = vadd.f32 %v1240, %v1241
      %v1243 = vsel %vm1127, %v1121, 0.0
      %v1244 = vadd.f32 %v1242, %v1243
      %v1245 = vsel %vm1127, %v1122, 0.0
      %v1246 = vadd.f32 %v1244, %v1245
      %v1247 = vsel %vm1127, %v1123, 0.0
      %v1248 = vadd.f32 %v1246, %v1247
      %v1249 = vsel %vm1127, %v1124, 0.0
      %v1250 = vadd.f32 %v1248, %v1249
      %v1251 = vsel %vm1127, %v1125, 0.0
      %v1252 = vadd.f32 %v1250, %v1251
      %v1253 = vsel %vm1127, %v1126, 0.0
      %v1254 = vadd.f32 %v1252, %v1253
      %v1255 = vrot.slane %v1254, 4
      %v1256 = vadd.f32 %v1254, %v1255
      %v1257 = vrot.slane %v1256, 2
      %v1258 = vadd.f32 %v1256, %v1257
      %v1259 = vrot.slane %v1258, 1
      %v1260 = vadd.f32 %v1258, %v1259
      %v1261 = vadd.f32 %v1260, %v994
      %v1262 = vand.u32 2147483647, %v1261
      %v1263 = vsel %vm1127, %v1262, -1.0
      %vm1264 = vcmask 1040384
      %v1265 = vsel %vm1264, %v997, -inf
      %v1266 = vsel %vm1264, %v998, -inf
      %v1267 = vmax.f32 %v1265, %v1266
      %1268 = vmax.xlane.f32.xlu0 %v1267
      %v1269 = vpop.xlane.xlu0 %1268
      %v1270 = vsel %vm1264, %v1263, -inf
      %v1271 = vsel %vm1264, -1.0, -inf
      %v1272 = vmax.f32 %v1270, %v1271
      %1273 = vmax.xlane.f32.xlu0 %v1272
      %v1274 = vpop.xlane.xlu0 %1273
      %v1275 = vadd.f32 %v1269, 1.0
      %v1276 = vadd.f32 %v1274, 1.0
      %v1277 = vadd.f32 %v1275, 0.0
      %v1278 = vadd.f32 %v1276, 0.0
      %v1279 = vmul.f32 %v1277, 0.5
      %v1280 = vmul.f32 %v1278, 0.5
      %vm1281 = vcmp.ge.f32.partialorder %v997, %v1279
      %vm1282 = vcmp.ge.f32.partialorder %v998, %v1279
      %vm1283 = vcmp.ge.f32.partialorder %v1263, %v1280
      %vm1284 = vcmp.ge.f32.partialorder -1.0, %v1280
      %v1285 = vsel %vm1281, 1, 0
      %v1286 = vsel %vm1282, 1, 0
      %v1287 = vsel %vm1283, 1, 0
      %v1288 = vsel %vm1284, 1, 0
      %v1289 = vcvt.s32.f32 %v1285
      %v1290 = vcvt.s32.f32 %v1286
      %v1291 = vcvt.s32.f32 %v1287
      %v1292 = vcvt.s32.f32 %v1288
      %v1293 = vsel %vm1264, %v1289, 0.0
      %v1294 = vsel %vm1264, %v1290, 0.0
      %v1295 = vadd.f32 %v1293, %v1294
      %1296 = vadd.xlane.f32.xlu0 %v1295
      %v1297 = vpop.xlane.xlu0 %1296
      %v1298 = vsel %vm1264, %v1291, 0.0
      %v1299 = vsel %vm1264, %v1292, 0.0
      %v1300 = vadd.f32 %v1298, %v1299
      %1301 = vadd.xlane.f32.xlu0 %v1300
      %v1302 = vpop.xlane.xlu0 %1301
      %vm1303 = vcmp.ge.f32.partialorder %v1297, 25.0
      %vm1304 = vcmp.ge.f32.partialorder %v1302, 6.0
      %v1305 = vsel %vm1303, %v1279, 0.0
      %v1306 = vsel %vm1304, %v1280, 0.0
      %v1307 = vsel %vm1303, %v1275, %v1279
      %v1308 = vsel %vm1304, %v1276, %v1280
      %v1309 = vadd.f32 %v1305, %v1307
      %v1310 = vadd.f32 %v1306, %v1308
      %v1311 = vmul.f32 %v1309, 0.5
      %v1312 = vmul.f32 %v1310, 0.5
      %1314 = vset.pattern.permute.xlu0 0
      %1315 = vperm.xlu0 %1314, %v1311
      %v1316 = vpop.permute.xlu0 %1315
      %1319 = vset.pattern.permute.xlu0 0
      %1320 = vperm.xlu0 %1319, %v1312
      %v1321 = vpop.permute.xlu0 %1320
      %vm1323 = vcmp.ge.f32.partialorder %v997, %v1316
      %vm1324 = vcmp.ge.f32.partialorder %v998, %v1316
      %vm1325 = vcmp.ge.f32.partialorder %v1263, %v1321
      %vm1326 = vcmp.ge.f32.partialorder -1.0, %v1321
      %v1327 = vsel %vm1323, 1, 0
      %v1328 = vsel %vm1324, 1, 0
      %v1329 = vsel %vm1325, 1, 0
      %v1330 = vsel %vm1326, 1, 0
      %v1331 = vcvt.s32.f32 %v1327
      %v1332 = vcvt.s32.f32 %v1328
      %v1333 = vcvt.s32.f32 %v1329
      %v1334 = vcvt.s32.f32 %v1330
      %v1335 = vsel %vm1264, %v1331, 0.0
      %v1336 = vsel %vm1264, %v1332, 0.0
      %v1337 = vadd.f32 %v1335, %v1336
      %1338 = vadd.xlane.f32.xlu0 %v1337
      %v1339 = vpop.xlane.xlu0 %1338
      %v1340 = vsel %vm1264, %v1333, 0.0
      %v1341 = vsel %vm1264, %v1334, 0.0
      %v1342 = vadd.f32 %v1340, %v1341
      %1343 = vadd.xlane.f32.xlu0 %v1342
      %v1344 = vpop.xlane.xlu0 %1343
      %vm1345 = vcmp.ge.f32.partialorder %v1339, 25.0
      %vm1346 = vcmp.ge.f32.partialorder %v1344, 6.0
      %v1347 = vsel %vm1345, %v1311, %v1305
      %v1348 = vsel %vm1346, %v1312, %v1306
      %v1349 = vsel %vm1345, %v1307, %v1311
      %v1350 = vsel %vm1346, %v1308, %v1312
      %v1351 = vadd.f32 %v1347, %v1349
      %v1352 = vadd.f32 %v1348, %v1350
      %v1353 = vmul.f32 %v1351, 0.5
      %v1354 = vmul.f32 %v1352, 0.5
      %1356 = vset.pattern.permute.xlu0 0
      %1357 = vperm.xlu0 %1356, %v1353
      %v1358 = vpop.permute.xlu0 %1357
      %1361 = vset.pattern.permute.xlu0 0
      %1362 = vperm.xlu0 %1361, %v1354
      %v1363 = vpop.permute.xlu0 %1362
      %vm1365 = vcmp.ge.f32.partialorder %v997, %v1358
      %vm1366 = vcmp.ge.f32.partialorder %v998, %v1358
      %vm1367 = vcmp.ge.f32.partialorder %v1263, %v1363
      %vm1368 = vcmp.ge.f32.partialorder -1.0, %v1363
      %v1369 = vsel %vm1365, 1, 0
      %v1370 = vsel %vm1366, 1, 0
      %v1371 = vsel %vm1367, 1, 0
      %v1372 = vsel %vm1368, 1, 0
      %v1373 = vcvt.s32.f32 %v1369
      %v1374 = vcvt.s32.f32 %v1370
      %v1375 = vcvt.s32.f32 %v1371
      %v1376 = vcvt.s32.f32 %v1372
      %v1377 = vsel %vm1264, %v1373, 0.0
      %v1378 = vsel %vm1264, %v1374, 0.0
      %v1379 = vadd.f32 %v1377, %v1378
      %1380 = vadd.xlane.f32.xlu0 %v1379
      %v1381 = vpop.xlane.xlu0 %1380
      %v1382 = vsel %vm1264, %v1375, 0.0
      %v1383 = vsel %vm1264, %v1376, 0.0
      %v1384 = vadd.f32 %v1382, %v1383
      %1385 = vadd.xlane.f32.xlu0 %v1384
      %v1386 = vpop.xlane.xlu0 %1385
      %vm1387 = vcmp.ge.f32.partialorder %v1381, 25.0
      %vm1388 = vcmp.ge.f32.partialorder %v1386, 6.0
      %v1389 = vsel %vm1387, %v1353, %v1347
      %v1390 = vsel %vm1388, %v1354, %v1348
      %v1391 = vsel %vm1387, %v1349, %v1353
      %v1392 = vsel %vm1388, %v1350, %v1354
      %v1393 = vadd.f32 %v1389, %v1391
      %v1394 = vadd.f32 %v1390, %v1392
      %v1395 = vmul.f32 %v1393, 0.5
      %v1396 = vmul.f32 %v1394, 0.5
      %1398 = vset.pattern.permute.xlu0 0
      %1399 = vperm.xlu0 %1398, %v1395
      %v1400 = vpop.permute.xlu0 %1399
      %1403 = vset.pattern.permute.xlu0 0
      %1404 = vperm.xlu0 %1403, %v1396
      %v1405 = vpop.permute.xlu0 %1404
      %vm1407 = vcmp.ge.f32.partialorder %v997, %v1400
      %vm1408 = vcmp.ge.f32.partialorder %v998, %v1400
      %vm1409 = vcmp.ge.f32.partialorder %v1263, %v1405
      %vm1410 = vcmp.ge.f32.partialorder -1.0, %v1405
      %v1411 = vsel %vm1407, 1, 0
      %v1412 = vsel %vm1408, 1, 0
      %v1413 = vsel %vm1409, 1, 0
      %v1414 = vsel %vm1410, 1, 0
      %v1415 = vcvt.s32.f32 %v1411
      %v1416 = vcvt.s32.f32 %v1412
      %v1417 = vcvt.s32.f32 %v1413
      %v1418 = vcvt.s32.f32 %v1414
      %v1419 = vsel %vm1264, %v1415, 0.0
      %v1420 = vsel %vm1264, %v1416, 0.0
      %v1421 = vadd.f32 %v1419, %v1420
      %1422 = vadd.xlane.f32.xlu0 %v1421
      %v1423 = vpop.xlane.xlu0 %1422
      %v1424 = vsel %vm1264, %v1417, 0.0
      %v1425 = vsel %vm1264, %v1418, 0.0
      %v1426 = vadd.f32 %v1424, %v1425
      %1427 = vadd.xlane.f32.xlu0 %v1426
      %v1428 = vpop.xlane.xlu0 %1427
      %vm1429 = vcmp.ge.f32.partialorder %v1423, 25.0
      %vm1430 = vcmp.ge.f32.partialorder %v1428, 6.0
      %v1431 = vsel %vm1429, %v1395, %v1389
      %v1432 = vsel %vm1430, %v1396, %v1390
      %v1433 = vsel %vm1429, %v1391, %v1395
      %v1434 = vsel %vm1430, %v1392, %v1396
      %v1435 = vadd.f32 %v1431, %v1433
      %v1436 = vadd.f32 %v1432, %v1434
      %v1437 = vmul.f32 %v1435, 0.5
      %v1438 = vmul.f32 %v1436, 0.5
      %1440 = vset.pattern.permute.xlu0 0
      %1441 = vperm.xlu0 %1440, %v1437
      %v1442 = vpop.permute.xlu0 %1441
      %1445 = vset.pattern.permute.xlu0 0
      %1446 = vperm.xlu0 %1445, %v1438
      %v1447 = vpop.permute.xlu0 %1446
      %vm1449 = vcmp.ge.f32.partialorder %v997, %v1442
      %vm1450 = vcmp.ge.f32.partialorder %v998, %v1442
      %vm1451 = vcmp.ge.f32.partialorder %v1263, %v1447
      %vm1452 = vcmp.ge.f32.partialorder -1.0, %v1447
      %v1453 = vsel %vm1449, 1, 0
      %v1454 = vsel %vm1450, 1, 0
      %v1455 = vsel %vm1451, 1, 0
      %v1456 = vsel %vm1452, 1, 0
      %v1457 = vcvt.s32.f32 %v1453
      %v1458 = vcvt.s32.f32 %v1454
      %v1459 = vcvt.s32.f32 %v1455
      %v1460 = vcvt.s32.f32 %v1456
      %v1461 = vsel %vm1264, %v1457, 0.0
      %v1462 = vsel %vm1264, %v1458, 0.0
      %v1463 = vadd.f32 %v1461, %v1462
      %1464 = vadd.xlane.f32.xlu0 %v1463
      %v1465 = vpop.xlane.xlu0 %1464
      %v1466 = vsel %vm1264, %v1459, 0.0
      %v1467 = vsel %vm1264, %v1460, 0.0
      %v1468 = vadd.f32 %v1466, %v1467
      %1469 = vadd.xlane.f32.xlu0 %v1468
      %v1470 = vpop.xlane.xlu0 %1469
      %vm1471 = vcmp.ge.f32.partialorder %v1465, 25.0
      %vm1472 = vcmp.ge.f32.partialorder %v1470, 6.0
      %v1473 = vsel %vm1471, %v1437, %v1431
      %v1474 = vsel %vm1472, %v1438, %v1432
      %v1475 = vsel %vm1471, %v1433, %v1437
      %v1476 = vsel %vm1472, %v1434, %v1438
      %v1477 = vadd.f32 %v1473, %v1475
      %v1478 = vadd.f32 %v1474, %v1476
      %v1479 = vmul.f32 %v1477, 0.5
      %v1480 = vmul.f32 %v1478, 0.5
      %1482 = vset.pattern.permute.xlu0 0
      %1483 = vperm.xlu0 %1482, %v1479
      %v1484 = vpop.permute.xlu0 %1483
      %1487 = vset.pattern.permute.xlu0 0
      %1488 = vperm.xlu0 %1487, %v1480
      %v1489 = vpop.permute.xlu0 %1488
      %vm1491 = vcmp.ge.f32.partialorder %v997, %v1484
      %vm1492 = vcmp.ge.f32.partialorder %v998, %v1484
      %vm1493 = vcmp.ge.f32.partialorder %v1263, %v1489
      %vm1494 = vcmp.ge.f32.partialorder -1.0, %v1489
      %v1495 = vsel %vm1491, 1, 0
      %v1496 = vsel %vm1492, 1, 0
      %v1497 = vsel %vm1493, 1, 0
      %v1498 = vsel %vm1494, 1, 0
      %v1499 = vcvt.s32.f32 %v1495
      %v1500 = vcvt.s32.f32 %v1496
      %v1501 = vcvt.s32.f32 %v1497
      %v1502 = vcvt.s32.f32 %v1498
      %v1503 = vsel %vm1264, %v1499, 0.0
      %v1504 = vsel %vm1264, %v1500, 0.0
      %v1505 = vadd.f32 %v1503, %v1504
      %1506 = vadd.xlane.f32.xlu0 %v1505
      %v1507 = vpop.xlane.xlu0 %1506
      %v1508 = vsel %vm1264, %v1501, 0.0
      %v1509 = vsel %vm1264, %v1502, 0.0
      %v1510 = vadd.f32 %v1508, %v1509
      %1511 = vadd.xlane.f32.xlu0 %v1510
      %v1512 = vpop.xlane.xlu0 %1511
      %vm1513 = vcmp.ge.f32.partialorder %v1507, 25.0
      %vm1514 = vcmp.ge.f32.partialorder %v1512, 6.0
      %v1515 = vsel %vm1513, %v1479, %v1473
      %v1516 = vsel %vm1514, %v1480, %v1474
      %v1517 = vsel %vm1513, %v1475, %v1479
      %v1518 = vsel %vm1514, %v1476, %v1480
      %v1519 = vadd.f32 %v1515, %v1517
      %v1520 = vadd.f32 %v1516, %v1518
      %v1521 = vmul.f32 %v1519, 0.5
      %v1522 = vmul.f32 %v1520, 0.5
      %1524 = vset.pattern.permute.xlu0 0
      %1525 = vperm.xlu0 %1524, %v1521
      %v1526 = vpop.permute.xlu0 %1525
      %1529 = vset.pattern.permute.xlu0 0
      %1530 = vperm.xlu0 %1529, %v1522
      %v1531 = vpop.permute.xlu0 %1530
      %vm1533 = vcmp.ge.f32.partialorder %v997, %v1526
      %vm1534 = vcmp.ge.f32.partialorder %v998, %v1526
      %vm1535 = vcmp.ge.f32.partialorder %v1263, %v1531
      %vm1536 = vcmp.ge.f32.partialorder -1.0, %v1531
      %v1537 = vsel %vm1533, 1, 0
      %v1538 = vsel %vm1534, 1, 0
      %v1539 = vsel %vm1535, 1, 0
      %v1540 = vsel %vm1536, 1, 0
      %v1541 = vcvt.s32.f32 %v1537
      %v1542 = vcvt.s32.f32 %v1538
      %v1543 = vcvt.s32.f32 %v1539
      %v1544 = vcvt.s32.f32 %v1540
      %v1545 = vsel %vm1264, %v1541, 0.0
      %v1546 = vsel %vm1264, %v1542, 0.0
      %v1547 = vadd.f32 %v1545, %v1546
      %1548 = vadd.xlane.f32.xlu0 %v1547
      %v1549 = vpop.xlane.xlu0 %1548
      %v1550 = vsel %vm1264, %v1543, 0.0
      %v1551 = vsel %vm1264, %v1544, 0.0
      %v1552 = vadd.f32 %v1550, %v1551
      %1553 = vadd.xlane.f32.xlu0 %v1552
      %v1554 = vpop.xlane.xlu0 %1553
      %vm1555 = vcmp.ge.f32.partialorder %v1549, 25.0
      %vm1556 = vcmp.ge.f32.partialorder %v1554, 6.0
      %v1557 = vsel %vm1555, %v1521, %v1515
      %v1558 = vsel %vm1556, %v1522, %v1516
      %v1559 = vsel %vm1555, %v1517, %v1521
      %v1560 = vsel %vm1556, %v1518, %v1522
      %v1561 = vadd.f32 %v1557, %v1559
      %v1562 = vadd.f32 %v1558, %v1560
      %v1563 = vmul.f32 %v1561, 0.5
      %v1564 = vmul.f32 %v1562, 0.5
      %1566 = vset.pattern.permute.xlu0 0
      %1567 = vperm.xlu0 %1566, %v1563
      %v1568 = vpop.permute.xlu0 %1567
      %1571 = vset.pattern.permute.xlu0 0
      %1572 = vperm.xlu0 %1571, %v1564
      %v1573 = vpop.permute.xlu0 %1572
      %vm1575 = vcmp.ge.f32.partialorder %v997, %v1568
      %vm1576 = vcmp.ge.f32.partialorder %v998, %v1568
      %vm1577 = vcmp.ge.f32.partialorder %v1263, %v1573
      %vm1578 = vcmp.ge.f32.partialorder -1.0, %v1573
      %v1579 = vsel %vm1575, 1, 0
      %v1580 = vsel %vm1576, 1, 0
      %v1581 = vsel %vm1577, 1, 0
      %v1582 = vsel %vm1578, 1, 0
      %v1583 = vcvt.s32.f32 %v1579
      %v1584 = vcvt.s32.f32 %v1580
      %v1585 = vcvt.s32.f32 %v1581
      %v1586 = vcvt.s32.f32 %v1582
      %v1587 = vsel %vm1264, %v1583, 0.0
      %v1588 = vsel %vm1264, %v1584, 0.0
      %v1589 = vadd.f32 %v1587, %v1588
      %1590 = vadd.xlane.f32.xlu0 %v1589
      %v1591 = vpop.xlane.xlu0 %1590
      %v1592 = vsel %vm1264, %v1585, 0.0
      %v1593 = vsel %vm1264, %v1586, 0.0
      %v1594 = vadd.f32 %v1592, %v1593
      %1595 = vadd.xlane.f32.xlu0 %v1594
      %v1596 = vpop.xlane.xlu0 %1595
      %vm1597 = vcmp.ge.f32.partialorder %v1591, 25.0
      %vm1598 = vcmp.ge.f32.partialorder %v1596, 6.0
      %v1599 = vsel %vm1597, %v1563, %v1557
      %v1600 = vsel %vm1598, %v1564, %v1558
      %v1601 = vsel %vm1597, %v1559, %v1563
      %v1602 = vsel %vm1598, %v1560, %v1564
      %v1603 = vadd.f32 %v1599, %v1601
      %v1604 = vadd.f32 %v1600, %v1602
      %v1605 = vmul.f32 %v1603, 0.5
      %v1606 = vmul.f32 %v1604, 0.5
      %1608 = vset.pattern.permute.xlu0 0
      %1609 = vperm.xlu0 %1608, %v1605
      %v1610 = vpop.permute.xlu0 %1609
      %1613 = vset.pattern.permute.xlu0 0
      %1614 = vperm.xlu0 %1613, %v1606
      %v1615 = vpop.permute.xlu0 %1614
      %vm1617 = vcmp.ge.f32.partialorder %v997, %v1610
      %vm1618 = vcmp.ge.f32.partialorder %v998, %v1610
      %vm1619 = vcmp.ge.f32.partialorder %v1263, %v1615
      %vm1620 = vcmp.ge.f32.partialorder -1.0, %v1615
      %v1621 = vsel %vm1617, 1, 0
      %v1622 = vsel %vm1618, 1, 0
      %v1623 = vsel %vm1619, 1, 0
      %v1624 = vsel %vm1620, 1, 0
      %v1625 = vcvt.s32.f32 %v1621
      %v1626 = vcvt.s32.f32 %v1622
      %v1627 = vcvt.s32.f32 %v1623
      %v1628 = vcvt.s32.f32 %v1624
      %v1629 = vsel %vm1264, %v1625, 0.0
      %v1630 = vsel %vm1264, %v1626, 0.0
      %v1631 = vadd.f32 %v1629, %v1630
      %1632 = vadd.xlane.f32.xlu0 %v1631
      %v1633 = vpop.xlane.xlu0 %1632
      %v1634 = vsel %vm1264, %v1627, 0.0
      %v1635 = vsel %vm1264, %v1628, 0.0
      %v1636 = vadd.f32 %v1634, %v1635
      %1637 = vadd.xlane.f32.xlu0 %v1636
      %v1638 = vpop.xlane.xlu0 %1637
      %vm1639 = vcmp.ge.f32.partialorder %v1633, 25.0
      %vm1640 = vcmp.ge.f32.partialorder %v1638, 6.0
      %v1641 = vsel %vm1639, %v1605, %v1599
      %v1642 = vsel %vm1640, %v1606, %v1600
      %v1643 = vsel %vm1639, %v1601, %v1605
      %v1644 = vsel %vm1640, %v1602, %v1606
      %v1645 = vadd.f32 %v1641, %v1643
      %v1646 = vadd.f32 %v1642, %v1644
      %v1647 = vmul.f32 %v1645, 0.5
      %v1648 = vmul.f32 %v1646, 0.5
      %1650 = vset.pattern.permute.xlu0 0
      %1651 = vperm.xlu0 %1650, %v1647
      %v1652 = vpop.permute.xlu0 %1651
      %1655 = vset.pattern.permute.xlu0 0
      %1656 = vperm.xlu0 %1655, %v1648
      %v1657 = vpop.permute.xlu0 %1656
      %vm1659 = vcmp.ge.f32.partialorder %v997, %v1652
      %vm1660 = vcmp.ge.f32.partialorder %v998, %v1652
      %vm1661 = vcmp.ge.f32.partialorder %v1263, %v1657
      %vm1662 = vcmp.ge.f32.partialorder -1.0, %v1657
      %v1663 = vsel %vm1659, 1, 0
      %v1664 = vsel %vm1660, 1, 0
      %v1665 = vsel %vm1661, 1, 0
      %v1666 = vsel %vm1662, 1, 0
      %v1667 = vcvt.s32.f32 %v1663
      %v1668 = vcvt.s32.f32 %v1664
      %v1669 = vcvt.s32.f32 %v1665
      %v1670 = vcvt.s32.f32 %v1666
      %v1671 = vsel %vm1264, %v1667, 0.0
      %v1672 = vsel %vm1264, %v1668, 0.0
      %v1673 = vadd.f32 %v1671, %v1672
      %1674 = vadd.xlane.f32.xlu0 %v1673
      %v1675 = vpop.xlane.xlu0 %1674
      %v1676 = vsel %vm1264, %v1669, 0.0
      %v1677 = vsel %vm1264, %v1670, 0.0
      %v1678 = vadd.f32 %v1676, %v1677
      %1679 = vadd.xlane.f32.xlu0 %v1678
      %v1680 = vpop.xlane.xlu0 %1679
      %vm1681 = vcmp.ge.f32.partialorder %v1675, 25.0
      %vm1682 = vcmp.ge.f32.partialorder %v1680, 6.0
      %v1683 = vsel %vm1681, %v1647, %v1641
      %v1684 = vsel %vm1682, %v1648, %v1642
      %v1685 = vsel %vm1681, %v1643, %v1647
      %v1686 = vsel %vm1682, %v1644, %v1648
      %v1687 = vadd.f32 %v1683, %v1685
      %v1688 = vadd.f32 %v1684, %v1686
      %v1689 = vmul.f32 %v1687, 0.5
      %v1690 = vmul.f32 %v1688, 0.5
      %1692 = vset.pattern.permute.xlu0 0
      %1693 = vperm.xlu0 %1692, %v1689
      %v1694 = vpop.permute.xlu0 %1693
      %1697 = vset.pattern.permute.xlu0 0
      %1698 = vperm.xlu0 %1697, %v1690
      %v1699 = vpop.permute.xlu0 %1698
      %vm1701 = vcmp.ge.f32.partialorder %v997, %v1694
      %vm1702 = vcmp.ge.f32.partialorder %v998, %v1694
      %vm1703 = vcmp.ge.f32.partialorder %v1263, %v1699
      %vm1704 = vcmp.ge.f32.partialorder -1.0, %v1699
      %v1705 = vsel %vm1701, 1, 0
      %v1706 = vsel %vm1702, 1, 0
      %v1707 = vsel %vm1703, 1, 0
      %v1708 = vsel %vm1704, 1, 0
      %v1709 = vcvt.s32.f32 %v1705
      %v1710 = vcvt.s32.f32 %v1706
      %v1711 = vcvt.s32.f32 %v1707
      %v1712 = vcvt.s32.f32 %v1708
      %v1713 = vsel %vm1264, %v1709, 0.0
      %v1714 = vsel %vm1264, %v1710, 0.0
      %v1715 = vadd.f32 %v1713, %v1714
      %1716 = vadd.xlane.f32.xlu0 %v1715
      %v1717 = vpop.xlane.xlu0 %1716
      %v1718 = vsel %vm1264, %v1711, 0.0
      %v1719 = vsel %vm1264, %v1712, 0.0
      %v1720 = vadd.f32 %v1718, %v1719
      %1721 = vadd.xlane.f32.xlu0 %v1720
      %v1722 = vpop.xlane.xlu0 %1721
      %vm1723 = vcmp.ge.f32.partialorder %v1717, 25.0
      %vm1724 = vcmp.ge.f32.partialorder %v1722, 6.0
      %v1725 = vsel %vm1723, %v1689, %v1683
      %v1726 = vsel %vm1724, %v1690, %v1684
      %v1727 = vsel %vm1723, %v1685, %v1689
      %v1728 = vsel %vm1724, %v1686, %v1690
      %v1729 = vadd.f32 %v1725, %v1727
      %v1730 = vadd.f32 %v1726, %v1728
      %v1731 = vmul.f32 %v1729, 0.5
      %v1732 = vmul.f32 %v1730, 0.5
      %1734 = vset.pattern.permute.xlu0 0
      %1735 = vperm.xlu0 %1734, %v1731
      %v1736 = vpop.permute.xlu0 %1735
      %1739 = vset.pattern.permute.xlu0 0
      %1740 = vperm.xlu0 %1739, %v1732
      %v1741 = vpop.permute.xlu0 %1740
      %vm1743 = vcmp.ge.f32.partialorder %v997, %v1736
      %vm1744 = vcmp.ge.f32.partialorder %v998, %v1736
      %vm1745 = vcmp.ge.f32.partialorder %v1263, %v1741
      %vm1746 = vcmp.ge.f32.partialorder -1.0, %v1741
      %v1747 = vsel %vm1743, 1, 0
      %v1748 = vsel %vm1744, 1, 0
      %v1749 = vsel %vm1745, 1, 0
      %v1750 = vsel %vm1746, 1, 0
      %v1751 = vcvt.s32.f32 %v1747
      %v1752 = vcvt.s32.f32 %v1748
      %v1753 = vcvt.s32.f32 %v1749
      %v1754 = vcvt.s32.f32 %v1750
      %v1755 = vsel %vm1264, %v1751, 0.0
      %v1756 = vsel %vm1264, %v1752, 0.0
      %v1757 = vadd.f32 %v1755, %v1756
      %1758 = vadd.xlane.f32.xlu0 %v1757
      %v1759 = vpop.xlane.xlu0 %1758
      %v1760 = vsel %vm1264, %v1753, 0.0
      %v1761 = vsel %vm1264, %v1754, 0.0
      %v1762 = vadd.f32 %v1760, %v1761
      %1763 = vadd.xlane.f32.xlu0 %v1762
      %v1764 = vpop.xlane.xlu0 %1763
      %vm1765 = vcmp.ge.f32.partialorder %v1759, 25.0
      %vm1766 = vcmp.ge.f32.partialorder %v1764, 6.0
      %v1767 = vsel %vm1765, %v1731, %v1725
      %v1768 = vsel %vm1766, %v1732, %v1726
      %v1769 = vsel %vm1765, %v1727, %v1731
      %v1770 = vsel %vm1766, %v1728, %v1732
      %v1771 = vadd.f32 %v1767, %v1769
      %v1772 = vadd.f32 %v1768, %v1770
      %v1773 = vmul.f32 %v1771, 0.5
      %v1774 = vmul.f32 %v1772, 0.5
      %1776 = vset.pattern.permute.xlu0 0
      %1777 = vperm.xlu0 %1776, %v1773
      %v1778 = vpop.permute.xlu0 %1777
      %1781 = vset.pattern.permute.xlu0 0
      %1782 = vperm.xlu0 %1781, %v1774
      %v1783 = vpop.permute.xlu0 %1782
      %vm1785 = vcmp.ge.f32.partialorder %v997, %v1778
      %vm1786 = vcmp.ge.f32.partialorder %v998, %v1778
      %vm1787 = vcmp.ge.f32.partialorder %v1263, %v1783
      %vm1788 = vcmp.ge.f32.partialorder -1.0, %v1783
      %v1789 = vsel %vm1785, 1, 0
      %v1790 = vsel %vm1786, 1, 0
      %v1791 = vsel %vm1787, 1, 0
      %v1792 = vsel %vm1788, 1, 0
      %v1793 = vcvt.s32.f32 %v1789
      %v1794 = vcvt.s32.f32 %v1790
      %v1795 = vcvt.s32.f32 %v1791
      %v1796 = vcvt.s32.f32 %v1792
      %v1797 = vsel %vm1264, %v1793, 0.0
      %v1798 = vsel %vm1264, %v1794, 0.0
      %v1799 = vadd.f32 %v1797, %v1798
      %1800 = vadd.xlane.f32.xlu0 %v1799
      %v1801 = vpop.xlane.xlu0 %1800
      %v1802 = vsel %vm1264, %v1795, 0.0
      %v1803 = vsel %vm1264, %v1796, 0.0
      %v1804 = vadd.f32 %v1802, %v1803
      %1805 = vadd.xlane.f32.xlu0 %v1804
      %v1806 = vpop.xlane.xlu0 %1805
      %vm1807 = vcmp.ge.f32.partialorder %v1801, 25.0
      %vm1808 = vcmp.ge.f32.partialorder %v1806, 6.0
      %v1809 = vsel %vm1807, %v1773, %v1767
      %v1810 = vsel %vm1808, %v1774, %v1768
      %v1811 = vsel %vm1807, %v1769, %v1773
      %v1812 = vsel %vm1808, %v1770, %v1774
      %v1813 = vadd.f32 %v1809, %v1811
      %v1814 = vadd.f32 %v1810, %v1812
      %v1815 = vmul.f32 %v1813, 0.5
      %v1816 = vmul.f32 %v1814, 0.5
      %1818 = vset.pattern.permute.xlu0 0
      %1819 = vperm.xlu0 %1818, %v1815
      %v1820 = vpop.permute.xlu0 %1819
      %1823 = vset.pattern.permute.xlu0 0
      %1824 = vperm.xlu0 %1823, %v1816
      %v1825 = vpop.permute.xlu0 %1824
      %vm1827 = vcmp.ge.f32.partialorder %v997, %v1820
      %vm1828 = vcmp.ge.f32.partialorder %v998, %v1820
      %vm1829 = vcmp.ge.f32.partialorder %v1263, %v1825
      %vm1830 = vcmp.ge.f32.partialorder -1.0, %v1825
      %v1831 = vsel %vm1827, 1, 0
      %v1832 = vsel %vm1828, 1, 0
      %v1833 = vsel %vm1829, 1, 0
      %v1834 = vsel %vm1830, 1, 0
      %v1835 = vcvt.s32.f32 %v1831
      %v1836 = vcvt.s32.f32 %v1832
      %v1837 = vcvt.s32.f32 %v1833
      %v1838 = vcvt.s32.f32 %v1834
      %v1839 = vsel %vm1264, %v1835, 0.0
      %v1840 = vsel %vm1264, %v1836, 0.0
      %v1841 = vadd.f32 %v1839, %v1840
      %1842 = vadd.xlane.f32.xlu0 %v1841
      %v1843 = vpop.xlane.xlu0 %1842
      %v1844 = vsel %vm1264, %v1837, 0.0
      %v1845 = vsel %vm1264, %v1838, 0.0
      %v1846 = vadd.f32 %v1844, %v1845
      %1847 = vadd.xlane.f32.xlu0 %v1846
      %v1848 = vpop.xlane.xlu0 %1847
      %vm1849 = vcmp.ge.f32.partialorder %v1843, 25.0
      %vm1850 = vcmp.ge.f32.partialorder %v1848, 6.0
      %v1851 = vsel %vm1849, %v1815, %v1809
      %v1852 = vsel %vm1850, %v1816, %v1810
      %v1853 = vsel %vm1849, %v1811, %v1815
      %v1854 = vsel %vm1850, %v1812, %v1816
      %v1855 = vadd.f32 %v1851, %v1853
      %v1856 = vadd.f32 %v1852, %v1854
      %v1857 = vmul.f32 %v1855, 0.5
      %v1858 = vmul.f32 %v1856, 0.5
      %1860 = vset.pattern.permute.xlu0 0
      %1861 = vperm.xlu0 %1860, %v1857
      %v1862 = vpop.permute.xlu0 %1861
      %1865 = vset.pattern.permute.xlu0 0
      %1866 = vperm.xlu0 %1865, %v1858
      %v1867 = vpop.permute.xlu0 %1866
      %vm1869 = vcmp.ge.f32.partialorder %v997, %v1862
      %vm1870 = vcmp.ge.f32.partialorder %v998, %v1862
      %vm1871 = vcmp.ge.f32.partialorder %v1263, %v1867
      %vm1872 = vcmp.ge.f32.partialorder -1.0, %v1867
      %v1873 = vsel %vm1869, 1, 0
      %v1874 = vsel %vm1870, 1, 0
      %v1875 = vsel %vm1871, 1, 0
      %v1876 = vsel %vm1872, 1, 0
      %v1877 = vcvt.s32.f32 %v1873
      %v1878 = vcvt.s32.f32 %v1874
      %v1879 = vcvt.s32.f32 %v1875
      %v1880 = vcvt.s32.f32 %v1876
      %v1881 = vsel %vm1264, %v1877, 0.0
      %v1882 = vsel %vm1264, %v1878, 0.0
      %v1883 = vadd.f32 %v1881, %v1882
      %1884 = vadd.xlane.f32.xlu0 %v1883
      %v1885 = vpop.xlane.xlu0 %1884
      %v1886 = vsel %vm1264, %v1879, 0.0
      %v1887 = vsel %vm1264, %v1880, 0.0
      %v1888 = vadd.f32 %v1886, %v1887
      %1889 = vadd.xlane.f32.xlu0 %v1888
      %v1890 = vpop.xlane.xlu0 %1889
      %vm1891 = vcmp.ge.f32.partialorder %v1885, 25.0
      %vm1892 = vcmp.ge.f32.partialorder %v1890, 6.0
      %v1893 = vsel %vm1891, %v1857, %v1851
      %v1894 = vsel %vm1892, %v1858, %v1852
      %v1895 = vsel %vm1891, %v1853, %v1857
      %v1896 = vsel %vm1892, %v1854, %v1858
      %v1897 = vadd.f32 %v1893, %v1895
      %v1898 = vadd.f32 %v1894, %v1896
      %v1899 = vmul.f32 %v1897, 0.5
      %v1900 = vmul.f32 %v1898, 0.5
      %1902 = vset.pattern.permute.xlu0 0
      %1903 = vperm.xlu0 %1902, %v1899
      %v1904 = vpop.permute.xlu0 %1903
      %1907 = vset.pattern.permute.xlu0 0
      %1908 = vperm.xlu0 %1907, %v1900
      %v1909 = vpop.permute.xlu0 %1908
      %vm1911 = vcmp.ge.f32.partialorder %v997, %v1904
      %vm1912 = vcmp.ge.f32.partialorder %v998, %v1904
      %vm1913 = vcmp.ge.f32.partialorder %v1263, %v1909
      %vm1914 = vcmp.ge.f32.partialorder -1.0, %v1909
      %v1915 = vsel %vm1911, 1, 0
      %v1916 = vsel %vm1912, 1, 0
      %v1917 = vsel %vm1913, 1, 0
      %v1918 = vsel %vm1914, 1, 0
      %v1919 = vcvt.s32.f32 %v1915
      %v1920 = vcvt.s32.f32 %v1916
      %v1921 = vcvt.s32.f32 %v1917
      %v1922 = vcvt.s32.f32 %v1918
      %v1923 = vsel %vm1264, %v1919, 0.0
      %v1924 = vsel %vm1264, %v1920, 0.0
      %v1925 = vadd.f32 %v1923, %v1924
      %1926 = vadd.xlane.f32.xlu0 %v1925
      %v1927 = vpop.xlane.xlu0 %1926
      %v1928 = vsel %vm1264, %v1921, 0.0
      %v1929 = vsel %vm1264, %v1922, 0.0
      %v1930 = vadd.f32 %v1928, %v1929
      %1931 = vadd.xlane.f32.xlu0 %v1930
      %v1932 = vpop.xlane.xlu0 %1931
      %vm1933 = vcmp.ge.f32.partialorder %v1927, 25.0
      %vm1934 = vcmp.ge.f32.partialorder %v1932, 6.0
      %v1935 = vsel %vm1933, %v1899, %v1893
      %v1936 = vsel %vm1934, %v1900, %v1894
      %v1937 = vsel %vm1933, %v1895, %v1899
      %v1938 = vsel %vm1934, %v1896, %v1900
      %v1939 = vadd.f32 %v1935, %v1937
      %v1940 = vadd.f32 %v1936, %v1938
      %v1941 = vmul.f32 %v1939, 0.5
      %v1942 = vmul.f32 %v1940, 0.5
      %1944 = vset.pattern.permute.xlu0 0
      %1945 = vperm.xlu0 %1944, %v1941
      %v1946 = vpop.permute.xlu0 %1945
      %1949 = vset.pattern.permute.xlu0 0
      %1950 = vperm.xlu0 %1949, %v1942
      %v1951 = vpop.permute.xlu0 %1950
      %vm1953 = vcmp.ge.f32.partialorder %v997, %v1946
      %vm1954 = vcmp.ge.f32.partialorder %v998, %v1946
      %vm1955 = vcmp.ge.f32.partialorder %v1263, %v1951
      %vm1956 = vcmp.ge.f32.partialorder -1.0, %v1951
      %v1957 = vsel %vm1953, 1, 0
      %v1958 = vsel %vm1954, 1, 0
      %v1959 = vsel %vm1955, 1, 0
      %v1960 = vsel %vm1956, 1, 0
      %v1961 = vcvt.s32.f32 %v1957
      %v1962 = vcvt.s32.f32 %v1958
      %v1963 = vcvt.s32.f32 %v1959
      %v1964 = vcvt.s32.f32 %v1960
      %v1965 = vsel %vm1264, %v1961, 0.0
      %v1966 = vsel %vm1264, %v1962, 0.0
      %v1967 = vadd.f32 %v1965, %v1966
      %1968 = vadd.xlane.f32.xlu0 %v1967
      %v1969 = vpop.xlane.xlu0 %1968
      %v1970 = vsel %vm1264, %v1963, 0.0
      %v1971 = vsel %vm1264, %v1964, 0.0
      %v1972 = vadd.f32 %v1970, %v1971
      %1973 = vadd.xlane.f32.xlu0 %v1972
      %v1974 = vpop.xlane.xlu0 %1973
      %vm1975 = vcmp.ge.f32.partialorder %v1969, 25.0
      %vm1976 = vcmp.ge.f32.partialorder %v1974, 6.0
      %v1977 = vsel %vm1975, %v1941, %v1935
      %v1978 = vsel %vm1976, %v1942, %v1936
      %v1979 = vsel %vm1975, %v1937, %v1941
      %v1980 = vsel %vm1976, %v1938, %v1942
      %v1981 = vadd.f32 %v1977, %v1979
      %v1982 = vadd.f32 %v1978, %v1980
      %v1983 = vmul.f32 %v1981, 0.5
      %v1984 = vmul.f32 %v1982, 0.5
      %1986 = vset.pattern.permute.xlu0 0
      %1987 = vperm.xlu0 %1986, %v1983
      %v1988 = vpop.permute.xlu0 %1987
      %1991 = vset.pattern.permute.xlu0 0
      %1992 = vperm.xlu0 %1991, %v1984
      %v1993 = vpop.permute.xlu0 %1992
      %vm1995 = vcmp.ge.f32.partialorder %v997, %v1988
      %vm1996 = vcmp.ge.f32.partialorder %v998, %v1988
      %vm1997 = vcmp.ge.f32.partialorder %v1263, %v1993
      %vm1998 = vcmp.ge.f32.partialorder -1.0, %v1993
      %v1999 = vsel %vm1995, 1, 0
      %v2000 = vsel %vm1996, 1, 0
      %v2001 = vsel %vm1997, 1, 0
      %v2002 = vsel %vm1998, 1, 0
      %v2003 = vcvt.s32.f32 %v1999
      %v2004 = vcvt.s32.f32 %v2000
      %v2005 = vcvt.s32.f32 %v2001
      %v2006 = vcvt.s32.f32 %v2002
      %v2007 = vsel %vm1264, %v2003, 0.0
      %v2008 = vsel %vm1264, %v2004, 0.0
      %v2009 = vadd.f32 %v2007, %v2008
      %2010 = vadd.xlane.f32.xlu0 %v2009
      %v2011 = vpop.xlane.xlu0 %2010
      %v2012 = vsel %vm1264, %v2005, 0.0
      %v2013 = vsel %vm1264, %v2006, 0.0
      %v2014 = vadd.f32 %v2012, %v2013
      %2015 = vadd.xlane.f32.xlu0 %v2014
      %v2016 = vpop.xlane.xlu0 %2015
      %vm2017 = vcmp.ge.f32.partialorder %v2011, 25.0
      %vm2018 = vcmp.ge.f32.partialorder %v2016, 6.0
      %v2019 = vsel %vm2017, %v1983, %v1977
      %v2020 = vsel %vm2018, %v1984, %v1978
      %v2021 = vsel %vm2017, %v1979, %v1983
      %v2022 = vsel %vm2018, %v1980, %v1984
      %v2023 = vadd.f32 %v2019, %v2021
      %v2024 = vadd.f32 %v2020, %v2022
      %v2025 = vmul.f32 %v2023, 0.5
      %v2026 = vmul.f32 %v2024, 0.5
      %2028 = vset.pattern.permute.xlu0 0
      %2029 = vperm.xlu0 %2028, %v2025
      %v2030 = vpop.permute.xlu0 %2029
      %2033 = vset.pattern.permute.xlu0 0
      %2034 = vperm.xlu0 %2033, %v2026
      %v2035 = vpop.permute.xlu0 %2034
      %vm2037 = vcmp.ge.f32.partialorder %v997, %v2030
      %vm2038 = vcmp.ge.f32.partialorder %v998, %v2030
      %vm2039 = vcmp.ge.f32.partialorder %v1263, %v2035
      %vm2040 = vcmp.ge.f32.partialorder -1.0, %v2035
      %v2041 = vsel %vm2037, 1, 0
      %v2042 = vsel %vm2038, 1, 0
      %v2043 = vsel %vm2039, 1, 0
      %v2044 = vsel %vm2040, 1, 0
      %v2045 = vcvt.s32.f32 %v2041
      %v2046 = vcvt.s32.f32 %v2042
      %v2047 = vcvt.s32.f32 %v2043
      %v2048 = vcvt.s32.f32 %v2044
      %v2049 = vsel %vm1264, %v2045, 0.0
      %v2050 = vsel %vm1264, %v2046, 0.0
      %v2051 = vadd.f32 %v2049, %v2050
      %2052 = vadd.xlane.f32.xlu0 %v2051
      %v2053 = vpop.xlane.xlu0 %2052
      %v2054 = vsel %vm1264, %v2047, 0.0
      %v2055 = vsel %vm1264, %v2048, 0.0
      %v2056 = vadd.f32 %v2054, %v2055
      %2057 = vadd.xlane.f32.xlu0 %v2056
      %v2058 = vpop.xlane.xlu0 %2057
      %vm2059 = vcmp.ge.f32.partialorder %v2053, 25.0
      %vm2060 = vcmp.ge.f32.partialorder %v2058, 6.0
      %v2061 = vsel %vm2059, %v2025, %v2019
      %v2062 = vsel %vm2060, %v2026, %v2020
      %v2063 = vsel %vm2059, %v2021, %v2025
      %v2064 = vsel %vm2060, %v2022, %v2026
      %v2065 = vadd.f32 %v2061, %v2063
      %v2066 = vadd.f32 %v2062, %v2064
      %v2067 = vmul.f32 %v2065, 0.5
      %v2068 = vmul.f32 %v2066, 0.5
      %2070 = vset.pattern.permute.xlu0 0
      %2071 = vperm.xlu0 %2070, %v2067
      %v2072 = vpop.permute.xlu0 %2071
      %2075 = vset.pattern.permute.xlu0 0
      %2076 = vperm.xlu0 %2075, %v2068
      %v2077 = vpop.permute.xlu0 %2076
      %vm2079 = vcmp.ge.f32.partialorder %v997, %v2072
      %vm2080 = vcmp.ge.f32.partialorder %v998, %v2072
      %vm2081 = vcmp.ge.f32.partialorder %v1263, %v2077
      %vm2082 = vcmp.ge.f32.partialorder -1.0, %v2077
      %v2083 = vsel %vm2079, 1, 0
      %v2084 = vsel %vm2080, 1, 0
      %v2085 = vsel %vm2081, 1, 0
      %v2086 = vsel %vm2082, 1, 0
      %v2087 = vcvt.s32.f32 %v2083
      %v2088 = vcvt.s32.f32 %v2084
      %v2089 = vcvt.s32.f32 %v2085
      %v2090 = vcvt.s32.f32 %v2086
      %v2091 = vsel %vm1264, %v2087, 0.0
      %v2092 = vsel %vm1264, %v2088, 0.0
      %v2093 = vadd.f32 %v2091, %v2092
      %2094 = vadd.xlane.f32.xlu0 %v2093
      %v2095 = vpop.xlane.xlu0 %2094
      %v2096 = vsel %vm1264, %v2089, 0.0
      %v2097 = vsel %vm1264, %v2090, 0.0
      %v2098 = vadd.f32 %v2096, %v2097
      %2099 = vadd.xlane.f32.xlu0 %v2098
      %v2100 = vpop.xlane.xlu0 %2099
      %vm2101 = vcmp.ge.f32.partialorder %v2095, 25.0
      %vm2102 = vcmp.ge.f32.partialorder %v2100, 6.0
      %v2103 = vsel %vm2101, %v2067, %v2061
      %v2104 = vsel %vm2102, %v2068, %v2062
      %2106 = vset.pattern.permute.xlu0 0
      %2107 = vperm.xlu0 %2106, %v2103
      %v2108 = vpop.permute.xlu0 %2107
      %2111 = vset.pattern.permute.xlu0 0
      %2112 = vperm.xlu0 %2111, %v2104
      %v2113 = vpop.permute.xlu0 %2112
      %vm2115 = vcmp.ge.f32.partialorder %v997, %v2108
      %vm2116 = vcmp.ge.f32.partialorder %v998, %v2108
      %vm2117 = vcmp.ge.f32.partialorder %v1263, %v2113
      %vm2118 = vcmp.ge.f32.partialorder -1.0, %v2113
      %v2119 = vsel %vm2115, 1, 0
      %v2120 = vsel %vm2116, 1, 0
      %v2121 = vsel %vm2117, 1, 0
      %v2122 = vsel %vm2118, 1, 0
      %v2123 = vcvt.s32.f32 %v2119
      %v2124 = vcvt.s32.f32 %v2120
      %v2125 = vcvt.s32.f32 %v2121
      %v2126 = vcvt.s32.f32 %v2122
      %v2127 = vsel %vm1264, %v2123, 0.0
      %v2128 = vsel %vm1264, %v2124, 0.0
      %v2129 = vadd.f32 %v2127, %v2128
      %2130 = vadd.xlane.f32.xlu0 %v2129
      %v2131 = vpop.xlane.xlu0 %2130
      %v2132 = vsel %vm1264, %v2125, 0.0
      %v2133 = vsel %vm1264, %v2126, 0.0
      %v2134 = vadd.f32 %v2132, %v2133
      %2135 = vadd.xlane.f32.xlu0 %v2134
      %v2136 = vpop.xlane.xlu0 %2135
      %v2137 = vmul.f32 %v997, %v2123
      %v2138 = vmul.f32 %v998, %v2124
      %v2139 = vmul.f32 %v1263, %v2125
      %v2140 = vmul.f32 %v2126, -1.0
      %v2141 = vsel %vm1264, %v2137, 0.0
      %v2142 = vsel %vm1264, %v2138, 0.0
      %v2143 = vadd.f32 %v2141, %v2142
      %2144 = vadd.xlane.f32.xlu0 %v2143
      %v2145 = vpop.xlane.xlu0 %2144
      %v2146 = vsel %vm1264, %v2139, 0.0
      %v2147 = vsel %vm1264, %v2140, 0.0
      %v2148 = vadd.f32 %v2146, %v2147
      %2149 = vadd.xlane.f32.xlu0 %v2148
      %v2150 = vpop.xlane.xlu0 %2149
      %v2151 = vsub.f32 %v2131, 25.0
      %v2152 = vsub.f32 %v2136, 6.0
      %v2153 = vmul.f32 %v2151, %v2103
      %v2154 = vmul.f32 %v2152, %v2104
      %v2155 = vsub.f32 %v2145, %v2153
      %v2156 = vsub.f32 %v2150, %v2154
      %v2157 = vmul.f32 %v2155, 0.04
      %v2158 = vmul.f32 %v2156, 0.16666667
      %v2159 = vmul.f32 %v2157, 0.5
      %v2160 = vmul.f32 %v2158, 0.5
      %v2161 = vadd.f32 %v2159, %v2160
      %vm2162 = vcmask 0
      %2163 = vst.msk [vmem:[%s214] sm:$0x1] %vm2162, %v2161
      %p2164 = scmp.lt.s32.totalorder %s16, 1
      %s2165 = scalar_select %p2164, %s16, 1
      %s2166 = scalar_lea.vmem %s4, %s2165
      // Predicated region
      $region37: #{tpu_custom_call.1} parent=35 // pred_check
        %p2167 = pneg %p128
      $region38: #{tpu_custom_call.1} parent=35 // pred_check_branch
        %2169 = sbr.rel (%p2167) target = $region40
      $region39: #{tpu_custom_call.1} parent=35 // pred_region
        _
      $region40: #{tpu_custom_call.1} parent=35 // pred_fallthru
        _
    $region36: #{tpu_custom_call.1} parent=5 // pred_fallthru
      _
    %p2170 = scmp.le.s32.totalorder 2, %s11
    // Predicated region
    $region41: #{tpu_custom_call.1} parent=5 // pred_check
      %p2171 = pneg %p2170
    $region42: #{tpu_custom_call.1} parent=5 // pred_check_branch
      %2173 = sbr.rel (%p2171) target = $region44
    $region43: #{tpu_custom_call.1} parent=5 // pred_region
      %s2174 = ssub.s32 %s11, 2
      // Predicated region
      $region45: #{tpu_custom_call.1} parent=43 // pred_check
        %p2175 = pneg %p134
      $region46: #{tpu_custom_call.1} parent=43 // pred_check_branch
        %2177 = sbr.rel (%p2175) target = $region48
      $region47: #{tpu_custom_call.1} parent=43 // pred_region
        %p2178 = scmp.lt.s32.totalorder %s17, 1
        %s2179 = scalar_select %p2178, %s17, 1
        %s2180 = scalar_lea.vmem %s4, %s2179
      $region48: #{tpu_custom_call.1} parent=43 // pred_fallthru
        _
    $region44: #{tpu_custom_call.1} parent=5 // pred_fallthru
      _
  $region6: #{tpu_custom_call.1} parent=0 // loop_footer
    %s15 = sadd.s32 1, %s11
  $region7: #{tpu_custom_call.1} parent=0 // loop_footer_branch
    %10 = sbr.rel target = $region3
  $region8: #{tpu_custom_call.1} parent=0 // loop_exit
    _

</llo_original>
